<compile_context>
chip_gen: v5e
topology: v5e:2x2
jax: 0.10.0
libtpu: 0.0.40
codegen_flags: <defaults>
</compile_context>

<pallas_src>
import functools

import jax
import jax.numpy as jnp
from jax.experimental import pallas as pl
from jax.experimental.pallas import tpu as pltpu


def kma_kernel(x_ref, wqall_ref, bqall_ref, wqi_ref, bqi_ref,
               kw_ref, kb_ref, vw_ref, vb_ref,
               out_ref, eng_ref, *, num_layers, h_size):
    """One token tile of the fused KMA forward.

    x_ref     : (tm, E)    bf16 token embeddings
    wqall_ref : (E, L*H)   bf16 fused inner query projections (pre-transposed)
    bqall_ref : (1, L*H)   f32  fused inner query biases
    wqi_ref   : (E, H)     bf16 inter-layer query projection (pre-transposed)
    bqi_ref   : (1, H)     f32
    kw_ref    : (L, H, I)  bf16 ffn key memories (pre-transposed)
    kb_ref    : (L, I)     f32
    vw_ref    : (L, I, H)  bf16 ffn value memories (pre-transposed)
    vb_ref    : (L, H)     f32
    out_ref   : (tm, H)    f32 tanh'd inter-layer attention output
    eng_ref   : (tm, L)    f32 pre-softmax inter-layer energies (return_weights)
    """
    x = x_ref[...]                                                   # (tm, E) bf16

    # All L inner query projections in a single MXU launch (N = L*H).
    q_all = jnp.dot(x, wqall_ref[...],
                    preferred_element_type=jnp.float32) + bqall_ref[...]
    q_all_bf = q_all.astype(jnp.bfloat16)                            # MXU input for key matmuls

    # Inter-layer query, kept f32 for the energy reduction.
    q_inter = jnp.dot(x, wqi_ref[...],
                      preferred_element_type=jnp.float32) + bqi_ref[...]

    kw = kw_ref[...]
    vw = vw_ref[...]
    kb = kb_ref[...]
    vb = vb_ref[...]

    o_layers = []
    e_cols = []
    # L is small and static -> unrolled Python loop (MXU hot path, no in-loop .T).
    for l in range(num_layers):
        q_l = q_all_bf[:, l * h_size:(l + 1) * h_size]               # (tm, H) bf16
        # energy_inner = q @ K_l (pre-transposed) + key_bias
        e_l = jnp.dot(q_l, kw[l],
                      preferred_element_type=jnp.float32) + kb[l:l + 1, :]   # (tm, I)
        # activation_memory_coef == 'relu'
        a_l = jnp.maximum(e_l, 0.0).astype(jnp.bfloat16)
        # output_inner = relu(e) @ V_l (pre-transposed) + value_bias
        o_l = jnp.dot(a_l, vw[l],
                      preferred_element_type=jnp.float32) + vb[l:l + 1, :]   # (tm, H)
        o_layers.append(o_l)
        # inter-layer energy: <o_l, q_inter> per token
        e_cols.append(jnp.sum(o_l * q_inter, axis=-1, keepdims=True))        # (tm, 1)

    e_inter = jnp.concatenate(e_cols, axis=-1)                       # (tm, L) pre-softmax

    # softmax over the layer axis (dim=2 in the PyTorch code)
    m = jnp.max(e_inter, axis=-1, keepdims=True)
    p = jnp.exp(e_inter - m)
    attn = p / jnp.sum(p, axis=-1, keepdims=True)                    # (tm, L)

    out = o_layers[0] * attn[:, 0:1]
    for l in range(1, num_layers):
        out = out + o_layers[l] * attn[:, l:l + 1]                   # (tm, H)

    out_ref[...] = jnp.tanh(out).astype(out_ref.dtype)
    eng_ref[...] = e_inter.astype(eng_ref.dtype)
    # TODO(synk): for tiny H / L a lane-dense output layout ((L, M) energies,
    # H padded to 128) would avoid masked vst; skipped to keep (M, ...) layout.


def kma_forward(embeds, params, *, tm=256):
    """embeds: (B, S, E) with E = 4*hidden.  Returns (output_km, return_weights)."""
    B, S, E = embeds.shape
    M = B * S

    wq, bq = params["wq"], params["bq"]        # (L,H,E), (L,H)
    wqi, bqi = params["wqi"], params["bqi"]    # (H,E), (1,H)
    kw, kb = params["kw"], params["kb"]        # (L,I,H), (L,I)
    vw, vb = params["vw"], params["vb"]        # (L,H,I), (L,H)
    L, H, _ = wq.shape
    I = kw.shape[1]

    # ---- host-side layout prep: pre-transpose / stack once, bf16 MXU inputs ----
    # (in a real deployment this would be done once at load time, not per call)
    wq_all = jnp.transpose(wq, (2, 0, 1)).reshape(E, L * H).astype(jnp.bfloat16)
    bq_all = bq.reshape(1, L * H).astype(jnp.float32)
    wqi_t = jnp.transpose(wqi, (1, 0)).astype(jnp.bfloat16)          # (E, H)
    kw_t = jnp.transpose(kw, (0, 2, 1)).astype(jnp.bfloat16)         # (L, H, I)
    vw_t = jnp.transpose(vw, (0, 2, 1)).astype(jnp.bfloat16)         # (L, I, H)
    bqi_f = bqi.astype(jnp.float32)
    kb_f = kb.astype(jnp.float32)
    vb_f = vb.astype(jnp.float32)

    x = embeds.reshape(M, E).astype(jnp.bfloat16)
    M_pad = pl.cdiv(M, tm) * tm
    if M_pad != M:                                                   # ragged token counts
        x = jnp.pad(x, ((0, M_pad - M), (0, 0)))

    kernel = functools.partial(kma_kernel, num_layers=int(L), h_size=int(H))

    flops = 2 * M_pad * (E * L * H + E * H + 2 * L * H * I)
    transcendentals = M_pad * (L + H)                                # exp + tanh
    bytes_accessed = (M_pad * E * 2
                      + (E * L * H + E * H + L * H * I + L * I * H) * 2
                      + (L * H + H + L * I + L * H) * 4
                      + M_pad * (H + L) * 4)

    out, eng = pl.pallas_call(
        kernel,
        out_shape=(jax.ShapeDtypeStruct((M_pad, H), jnp.float32),
                   jax.ShapeDtypeStruct((M_pad, L), jnp.float32)),
        grid_spec=pltpu.PrefetchScalarGridSpec(
            num_scalar_prefetch=0,
            grid=(M_pad // tm,),
            in_specs=[
                pl.BlockSpec((tm, E), lambda i: (i, 0)),             # token tile
                # Weights/biases: constant index_map -> block stays resident
                # across the grid (no re-DMA of the same block).
                # TODO(synk): at realistic FFN-memory sizes on v7x (64 MiB VMEM)
                # add a layer-streaming 'arbitrary' grid axis with per-layer
                # (1,H,I)/(1,I,H) blocks and an o/eng VMEM scratch.
                pl.BlockSpec((E, L * H), lambda i: (0, 0)),          # fused Wq
                pl.BlockSpec((1, L * H), lambda i: (0, 0)),          # fused bq
                pl.BlockSpec((E, H), lambda i: (0, 0)),              # Wqi
                pl.BlockSpec((1, H), lambda i: (0, 0)),              # bqi
                pl.BlockSpec((L, H, I), lambda i: (0, 0, 0)),        # key mem
                pl.BlockSpec((L, I), lambda i: (0, 0)),              # key bias
                pl.BlockSpec((L, I, H), lambda i: (0, 0, 0)),        # value mem
                pl.BlockSpec((L, H), lambda i: (0, 0)),              # value bias
            ],
            out_specs=[
                pl.BlockSpec((tm, H), lambda i: (i, 0)),
                pl.BlockSpec((tm, L), lambda i: (i, 0)),
            ],
        ),
        compiler_params=pltpu.CompilerParams(
            dimension_semantics=("parallel",),
            vmem_limit_bytes=32 * 1024 * 1024),
        cost_estimate=pl.CostEstimate(flops=int(flops),
                                      transcendentals=int(transcendentals),
                                      bytes_accessed=int(bytes_accessed)),
    )(x, wq_all, bq_all, wqi_t, bqi_f, kw_t, kb_f, vw_t, vb_f)

    return out[:M].reshape(B, S, H), eng[:M].reshape(B, S, L)


def kma_reference(embeds, params):
    """Pure-JAX f32 reference mirroring the PyTorch forward (relu / add_bias / linear q_map)."""
    hp = jax.lax.Precision.HIGHEST
    wq, bq = params["wq"], params["bq"]
    wqi, bqi = params["wqi"], params["bqi"]
    kw, kb = params["kw"], params["kb"]
    vw, vb = params["vw"], params["vb"]

    q = jnp.einsum("bse,lhe->blsh", embeds, wq, precision=hp) + bq[None, :, None, :]
    e = jnp.einsum("blsh,lih->blsi", q, kw, precision=hp) + kb[None, :, None, :]
    a = jax.nn.relu(e)
    o = jnp.einsum("blsi,lhi->blsh", a, vw, precision=hp) + vb[None, :, None, :]
    o = jnp.transpose(o, (0, 2, 1, 3))                               # (B,S,L,H)
    qi = jnp.einsum("bse,he->bsh", embeds, wqi, precision=hp) + bqi[0]
    eng = jnp.einsum("bslh,bsh->bsl", o, qi, precision=hp)
    attn = jax.nn.softmax(eng, axis=-1)
    out = jnp.einsum("bslh,bsl->bsh", o, attn, precision=hp)
    return jnp.tanh(out), eng


def init_params(key, *, num_layers, hidden_size, ffn_hk_size, ffn_inter_size):
    """Deterministic synthetic parameters (nn.Linear-style init for projections,
    small random FFN 'memories' standing in for the pretrained LM weights)."""
    E = 4 * hidden_size
    H = ffn_hk_size
    I = ffn_inter_size
    L = num_layers
    ks = jax.random.split(key, 8)
    lin_scale = 1.0 / jnp.sqrt(jnp.float32(E))
    mem_scale = 0.05
    return {
        "wq": jax.random.normal(ks[0], (L, H, E), jnp.float32) * lin_scale,
        "bq": jax.random.normal(ks[1], (L, H), jnp.float32) * lin_scale,
        "wqi": jax.random.normal(ks[2], (H, E), jnp.float32) * lin_scale,
        "bqi": jax.random.normal(ks[3], (1, H), jnp.float32) * lin_scale,
        "kw": jax.random.normal(ks[4], (L, I, H), jnp.float32) * mem_scale,
        "kb": jax.random.normal(ks[5], (L, I), jnp.float32) * mem_scale,
        "vw": jax.random.normal(ks[6], (L, H, I), jnp.float32) * mem_scale,
        "vb": jax.random.normal(ks[7], (L, H), jnp.float32) * mem_scale,
    }


if __name__ == "__main__":
    # Small shapes consistent with the module:
    #   hidden_size=32 -> embeds feature dim = 4*32 = 128
    #   ffn_hk_size (H) = 32, ffn_inter_size (I) = 64, 2 activated layers
    B, S = 2, 8
    hidden_size = 32
    H, I, L = 32, 64, 2
    E = 4 * hidden_size

    key = jax.random.PRNGKey(0)
    k_x, k_p = jax.random.split(key)
    embeds = jax.random.normal(k_x, (B, S, E), jnp.float32)
    params = init_params(k_p, num_layers=L, hidden_size=hidden_size,
                         ffn_hk_size=H, ffn_inter_size=I)

    kma = jax.jit(functools.partial(kma_forward, tm=256))
    out_km, ret_w = kma(embeds, params)
    out_km = jax.block_until_ready(out_km)
    ret_w = jax.block_until_ready(ret_w)
    assert out_km.shape == (B, S, H) and ret_w.shape == (B, S, L)

    # 1) Strict implementation check: same math evaluated on the exact
    #    bf16-quantized weights/embeddings the kernel consumes (biases stay f32).
    qparams = dict(params)
    for name in ("wq", "wqi", "kw", "vw"):
        qparams[name] = params[name].astype(jnp.bfloat16).astype(jnp.float32)
    embeds_q = embeds.astype(jnp.bfloat16).astype(jnp.float32)
    refq_km, refq_w = kma_reference(embeds_q, qparams)
    assert jnp.allclose(out_km, refq_km, rtol=1e-2, atol=1e-2)
    assert jnp.allclose(ret_w, refq_w, rtol=1e-2, atol=1e-2)

    # 2) End-to-end check against the full-precision reference.  bf16 MXU inputs
    #    (f32 accumulation) bound the pre-softmax energies to ~1e-2 absolute,
    #    hence the slightly wider atol on return_weights only.
    ref_km, ref_w = kma_reference(embeds, params)
    assert jnp.allclose(out_km, ref_km, rtol=1e-2, atol=1e-2)
    assert jnp.allclose(ret_w, ref_w, rtol=1e-2, atol=2e-2)

    # TODO(synk): dropout inside the custom `Linear`/QMLP modules is identity at
    # inference and is intentionally omitted; q_map='mlp' variant not implemented.
    print("KERNEL_OK")
</pallas_src>

<mosaic_0001>
module attributes {stable_mosaic.version = 11 : i64} {
  func.func @kma_kernel(%arg0: i32, %arg1: memref<256x128xbf16, #tpu.memory_space<vmem>>, %arg2: memref<128x64xbf16, #tpu.memory_space<vmem>>, %arg3: memref<1x64xf32, #tpu.memory_space<vmem>>, %arg4: memref<128x32xbf16, #tpu.memory_space<vmem>>, %arg5: memref<1x32xf32, #tpu.memory_space<vmem>>, %arg6: memref<2x32x64xbf16, #tpu.memory_space<vmem>>, %arg7: memref<2x64xf32, #tpu.memory_space<vmem>>, %arg8: memref<2x64x32xbf16, #tpu.memory_space<vmem>>, %arg9: memref<2x32xf32, #tpu.memory_space<vmem>>, %arg10: memref<256x32xf32, #tpu.memory_space<vmem>>, %arg11: memref<256x2xf32, #tpu.memory_space<vmem>>) attributes {dimension_semantics = [#tpu.dimension_semantics<parallel>], iteration_bounds = array<i64: 1>, scalar_prefetch = 0 : i64, scratch_operands = 0 : i64, tpu.core_type = #tpu.core_type<tc>, window_params = [{transform_indices = @transform_0, window_bounds = array<i64: 256, 128>}, {pipeline_mode = #tpu.pipeline_mode<synchronous>, transform_indices = @transform_1, window_bounds = array<i64: 128, 64>}, {pipeline_mode = #tpu.pipeline_mode<synchronous>, transform_indices = @transform_2, window_bounds = array<i64: 1, 64>}, {pipeline_mode = #tpu.pipeline_mode<synchronous>, transform_indices = @transform_3, window_bounds = array<i64: 128, 32>}, {pipeline_mode = #tpu.pipeline_mode<synchronous>, transform_indices = @transform_4, window_bounds = array<i64: 1, 32>}, {pipeline_mode = #tpu.pipeline_mode<synchronous>, transform_indices = @transform_5, window_bounds = array<i64: 2, 32, 64>}, {pipeline_mode = #tpu.pipeline_mode<synchronous>, transform_indices = @transform_6, window_bounds = array<i64: 2, 64>}, {pipeline_mode = #tpu.pipeline_mode<synchronous>, transform_indices = @transform_7, window_bounds = array<i64: 2, 64, 32>}, {pipeline_mode = #tpu.pipeline_mode<synchronous>, transform_indices = @transform_8, window_bounds = array<i64: 2, 32>}, {transform_indices = @transform_9, window_bounds = array<i64: 256, 32>}, {transform_indices = @transform_10, window_bounds = array<i64: 256, 2>}]} {
    %c0 = arith.constant 0 : index
    %c0_0 = arith.constant 0 : index
    %0 = vector.load %arg1[%c0, %c0_0] : memref<256x128xbf16, #tpu.memory_space<vmem>>, vector<256x128xbf16>
    %c0_1 = arith.constant 0 : index
    %c0_2 = arith.constant 0 : index
    %1 = vector.load %arg2[%c0_1, %c0_2] : memref<128x64xbf16, #tpu.memory_space<vmem>>, vector<128x64xbf16>
    %cst = arith.constant dense<0.000000e+00> : vector<256x64xf32>
    %2 = tpu.matmul %0, %1, %cst {dimension_numbers = #tpu.dot_dimension_numbers<[1], [0], [0], [1], [0, 0, 1, 1], [], []>} : vector<256x128xbf16>, vector<128x64xbf16>, vector<256x64xf32> -> vector<256x64xf32>
    %c0_3 = arith.constant 0 : index
    %c0_4 = arith.constant 0 : index
    %3 = vector.load %arg3[%c0_3, %c0_4] : memref<1x64xf32, #tpu.memory_space<vmem>>, vector<1x64xf32>
    %4 = vector.broadcast %3 : vector<1x64xf32> to vector<256x64xf32>
    %5 = arith.addf %2, %4 : vector<256x64xf32>
    %6 = arith.truncf %5 : vector<256x64xf32> to vector<256x64xbf16>
    %c0_5 = arith.constant 0 : index
    %c0_6 = arith.constant 0 : index
    %7 = vector.load %arg4[%c0_5, %c0_6] : memref<128x32xbf16, #tpu.memory_space<vmem>>, vector<128x32xbf16>
    %cst_7 = arith.constant dense<0.000000e+00> : vector<256x32xf32>
    %8 = tpu.matmul %0, %7, %cst_7 {dimension_numbers = #tpu.dot_dimension_numbers<[1], [0], [0], [1], [0, 0, 1, 1], [], []>} : vector<256x128xbf16>, vector<128x32xbf16>, vector<256x32xf32> -> vector<256x32xf32>
    %c0_8 = arith.constant 0 : index
    %c0_9 = arith.constant 0 : index
    %9 = vector.load %arg5[%c0_8, %c0_9] : memref<1x32xf32, #tpu.memory_space<vmem>>, vector<1x32xf32>
    %10 = vector.broadcast %9 : vector<1x32xf32> to vector<256x32xf32>
    %11 = arith.addf %8, %10 : vector<256x32xf32>
    %c0_10 = arith.constant 0 : index
    %c0_11 = arith.constant 0 : index
    %c0_12 = arith.constant 0 : index
    %12 = vector.load %arg6[%c0_10, %c0_11, %c0_12] : memref<2x32x64xbf16, #tpu.memory_space<vmem>>, vector<2x32x64xbf16>
    %c0_13 = arith.constant 0 : index
    %c0_14 = arith.constant 0 : index
    %c0_15 = arith.constant 0 : index
    %13 = vector.load %arg8[%c0_13, %c0_14, %c0_15] : memref<2x64x32xbf16, #tpu.memory_space<vmem>>, vector<2x64x32xbf16>
    %c0_16 = arith.constant 0 : index
    %c0_17 = arith.constant 0 : index
    %14 = vector.load %arg7[%c0_16, %c0_17] : memref<2x64xf32, #tpu.memory_space<vmem>>, vector<2x64xf32>
    %c0_18 = arith.constant 0 : index
    %c0_19 = arith.constant 0 : index
    %15 = vector.load %arg9[%c0_18, %c0_19] : memref<2x32xf32, #tpu.memory_space<vmem>>, vector<2x32xf32>
    %16 = vector.extract_strided_slice %6 {offsets = [0, 0], sizes = [256, 32], strides = [1, 1]} : vector<256x64xbf16> to vector<256x32xbf16>
    %17 = vector.extract_strided_slice %12 {offsets = [0, 0, 0], sizes = [1, 32, 64], strides = [1, 1, 1]} : vector<2x32x64xbf16> to vector<1x32x64xbf16>
    %18 = vector.shape_cast %17 : vector<1x32x64xbf16> to vector<32x64xbf16>
    %cst_20 = arith.constant dense<0.000000e+00> : vector<256x64xf32>
    %19 = tpu.matmul %16, %18, %cst_20 {dimension_numbers = #tpu.dot_dimension_numbers<[1], [0], [0], [1], [0, 0, 1, 1], [], []>} : vector<256x32xbf16>, vector<32x64xbf16>, vector<256x64xf32> -> vector<256x64xf32>
    %20 = vector.extract_strided_slice %14 {offsets = [0, 0], sizes = [1, 64], strides = [1, 1]} : vector<2x64xf32> to vector<1x64xf32>
    %21 = vector.broadcast %20 : vector<1x64xf32> to vector<256x64xf32>
    %22 = arith.addf %19, %21 : vector<256x64xf32>
    %cst_21 = arith.constant 0.000000e+00 : f32
    %23 = vector.broadcast %cst_21 : f32 to vector<256x64xf32>
    %24 = arith.maximumf %22, %23 : vector<256x64xf32>
    %25 = arith.truncf %24 : vector<256x64xf32> to vector<256x64xbf16>
    %26 = vector.extract_strided_slice %13 {offsets = [0, 0, 0], sizes = [1, 64, 32], strides = [1, 1, 1]} : vector<2x64x32xbf16> to vector<1x64x32xbf16>
    %27 = vector.shape_cast %26 : vector<1x64x32xbf16> to vector<64x32xbf16>
    %cst_22 = arith.constant dense<0.000000e+00> : vector<256x32xf32>
    %28 = tpu.matmul %25, %27, %cst_22 {dimension_numbers = #tpu.dot_dimension_numbers<[1], [0], [0], [1], [0, 0, 1, 1], [], []>} : vector<256x64xbf16>, vector<64x32xbf16>, vector<256x32xf32> -> vector<256x32xf32>
    %29 = vector.extract_strided_slice %15 {offsets = [0, 0], sizes = [1, 32], strides = [1, 1]} : vector<2x32xf32> to vector<1x32xf32>
    %30 = vector.broadcast %29 : vector<1x32xf32> to vector<256x32xf32>
    %31 = arith.addf %28, %30 : vector<256x32xf32>
    %32 = arith.mulf %31, %11 : vector<256x32xf32>
    %cst_23 = arith.constant dense<0.000000e+00> : vector<256xf32>
    %33 = vector.multi_reduction <add>, %32, %cst_23 [1] : vector<256x32xf32> to vector<256xf32>
    %34 = vector.shape_cast %33 : vector<256xf32> to vector<256x1xf32>
    %35 = vector.extract_strided_slice %6 {offsets = [0, 32], sizes = [256, 32], strides = [1, 1]} : vector<256x64xbf16> to vector<256x32xbf16>
    %36 = vector.extract_strided_slice %12 {offsets = [1, 0, 0], sizes = [1, 32, 64], strides = [1, 1, 1]} : vector<2x32x64xbf16> to vector<1x32x64xbf16>
    %37 = vector.shape_cast %36 : vector<1x32x64xbf16> to vector<32x64xbf16>
    %cst_24 = arith.constant dense<0.000000e+00> : vector<256x64xf32>
    %38 = tpu.matmul %35, %37, %cst_24 {dimension_numbers = #tpu.dot_dimension_numbers<[1], [0], [0], [1], [0, 0, 1, 1], [], []>} : vector<256x32xbf16>, vector<32x64xbf16>, vector<256x64xf32> -> vector<256x64xf32>
    %39 = vector.extract_strided_slice %14 {offsets = [1, 0], sizes = [1, 64], strides = [1, 1]} : vector<2x64xf32> to vector<1x64xf32>
    %40 = vector.broadcast %39 : vector<1x64xf32> to vector<256x64xf32>
    %41 = arith.addf %38, %40 : vector<256x64xf32>
    %cst_25 = arith.constant 0.000000e+00 : f32
    %42 = vector.broadcast %cst_25 : f32 to vector<256x64xf32>
    %43 = arith.maximumf %41, %42 : vector<256x64xf32>
    %44 = arith.truncf %43 : vector<256x64xf32> to vector<256x64xbf16>
    %45 = vector.extract_strided_slice %13 {offsets = [1, 0, 0], sizes = [1, 64, 32], strides = [1, 1, 1]} : vector<2x64x32xbf16> to vector<1x64x32xbf16>
    %46 = vector.shape_cast %45 : vector<1x64x32xbf16> to vector<64x32xbf16>
    %cst_26 = arith.constant dense<0.000000e+00> : vector<256x32xf32>
    %47 = tpu.matmul %44, %46, %cst_26 {dimension_numbers = #tpu.dot_dimension_numbers<[1], [0], [0], [1], [0, 0, 1, 1], [], []>} : vector<256x64xbf16>, vector<64x32xbf16>, vector<256x32xf32> -> vector<256x32xf32>
    %48 = vector.extract_strided_slice %15 {offsets = [1, 0], sizes = [1, 32], strides = [1, 1]} : vector<2x32xf32> to vector<1x32xf32>
    %49 = vector.broadcast %48 : vector<1x32xf32> to vector<256x32xf32>
    %50 = arith.addf %47, %49 : vector<256x32xf32>
    %51 = arith.mulf %50, %11 : vector<256x32xf32>
    %cst_27 = arith.constant dense<0.000000e+00> : vector<256xf32>
    %52 = vector.multi_reduction <add>, %51, %cst_27 [1] : vector<256x32xf32> to vector<256xf32>
    %53 = vector.shape_cast %52 : vector<256xf32> to vector<256x1xf32>
    %54 = tpu.concatenate %34, %53 in 1 : vector<256x1xf32>, vector<256x1xf32> -> vector<256x2xf32>
    %cst_28 = arith.constant dense<0xFF800000> : vector<256xf32>
    %55 = vector.multi_reduction <maximumf>, %54, %cst_28 [1] : vector<256x2xf32> to vector<256xf32>
    %56 = vector.shape_cast %55 : vector<256xf32> to vector<256x1xf32>
    %57 = vector.broadcast %56 : vector<256x1xf32> to vector<256x2xf32>
    %58 = arith.subf %54, %57 : vector<256x2xf32>
    %59 = math.exp %58 : vector<256x2xf32>
    %cst_29 = arith.constant dense<0.000000e+00> : vector<256xf32>
    %60 = vector.multi_reduction <add>, %59, %cst_29 [1] : vector<256x2xf32> to vector<256xf32>
    %61 = vector.shape_cast %60 : vector<256xf32> to vector<256x1xf32>
    %62 = vector.broadcast %61 : vector<256x1xf32> to vector<256x2xf32>
    %63 = arith.divf %59, %62 : vector<256x2xf32>
    %64 = vector.extract_strided_slice %63 {offsets = [0, 0], sizes = [256, 1], strides = [1, 1]} : vector<256x2xf32> to vector<256x1xf32>
    %65 = vector.broadcast %64 : vector<256x1xf32> to vector<256x32xf32>
    %66 = arith.mulf %31, %65 : vector<256x32xf32>
    %67 = vector.extract_strided_slice %63 {offsets = [0, 1], sizes = [256, 1], strides = [1, 1]} : vector<256x2xf32> to vector<256x1xf32>
    %68 = vector.broadcast %67 : vector<256x1xf32> to vector<256x32xf32>
    %69 = arith.mulf %50, %68 : vector<256x32xf32>
    %70 = arith.addf %66, %69 : vector<256x32xf32>
    %71 = math.tanh %70 : vector<256x32xf32>
    %c0_30 = arith.constant 0 : index
    %c0_31 = arith.constant 0 : index
    %72 = vector.load %arg10[%c0_30, %c0_31] : memref<256x32xf32, #tpu.memory_space<vmem>>, vector<256x32xf32>
    tpu.vector_store %arg10[%c0_30, %c0_31], %71 {strides = array<i32>} : memref<256x32xf32, #tpu.memory_space<vmem>>, vector<256x32xf32>,
    %c0_32 = arith.constant 0 : index
    %c0_33 = arith.constant 0 : index
    %73 = vector.load %arg11[%c0_32, %c0_33] : memref<256x2xf32, #tpu.memory_space<vmem>>, vector<256x2xf32>
    tpu.vector_store %arg11[%c0_32, %c0_33], %54 {strides = array<i32>} : memref<256x2xf32, #tpu.memory_space<vmem>>, vector<256x2xf32>,
    return
  }
  func.func @transform_0(%arg0: i32) -> (i32, i32) {
    %c0_i32 = arith.constant 0 : i32
    %c0_i32_0 = arith.constant 0 : i32
    return %arg0, %c0_i32 : i32, i32
  }
  func.func @transform_1(%arg0: i32) -> (i32, i32) {
    %c0_i32 = arith.constant 0 : i32
    %c0_i32_0 = arith.constant 0 : i32
    %c0_i32_1 = arith.constant 0 : i32
    return %c0_i32, %c0_i32_0 : i32, i32
  }
  func.func @transform_2(%arg0: i32) -> (i32, i32) {
    %c0_i32 = arith.constant 0 : i32
    %c0_i32_0 = arith.constant 0 : i32
    %c0_i32_1 = arith.constant 0 : i32
    return %c0_i32, %c0_i32_0 : i32, i32
  }
  func.func @transform_3(%arg0: i32) -> (i32, i32) {
    %c0_i32 = arith.constant 0 : i32
    %c0_i32_0 = arith.constant 0 : i32
    %c0_i32_1 = arith.constant 0 : i32
    return %c0_i32, %c0_i32_0 : i32, i32
  }
  func.func @transform_4(%arg0: i32) -> (i32, i32) {
    %c0_i32 = arith.constant 0 : i32
    %c0_i32_0 = arith.constant 0 : i32
    %c0_i32_1 = arith.constant 0 : i32
    return %c0_i32, %c0_i32_0 : i32, i32
  }
  func.func @transform_5(%arg0: i32) -> (i32, i32, i32) {
    %c0_i32 = arith.constant 0 : i32
    %c0_i32_0 = arith.constant 0 : i32
    %c0_i32_1 = arith.constant 0 : i32
    %c0_i32_2 = arith.constant 0 : i32
    return %c0_i32, %c0_i32_0, %c0_i32_1 : i32, i32, i32
  }
  func.func @transform_6(%arg0: i32) -> (i32, i32) {
    %c0_i32 = arith.constant 0 : i32
    %c0_i32_0 = arith.constant 0 : i32
    %c0_i32_1 = arith.constant 0 : i32
    return %c0_i32, %c0_i32_0 : i32, i32
  }
  func.func @transform_7(%arg0: i32) -> (i32, i32, i32) {
    %c0_i32 = arith.constant 0 : i32
    %c0_i32_0 = arith.constant 0 : i32
    %c0_i32_1 = arith.constant 0 : i32
    %c0_i32_2 = arith.constant 0 : i32
    return %c0_i32, %c0_i32_0, %c0_i32_1 : i32, i32, i32
  }
  func.func @transform_8(%arg0: i32) -> (i32, i32) {
    %c0_i32 = arith.constant 0 : i32
    %c0_i32_0 = arith.constant 0 : i32
    %c0_i32_1 = arith.constant 0 : i32
    return %c0_i32, %c0_i32_0 : i32, i32
  }
  func.func @transform_9(%arg0: i32) -> (i32, i32) {
    %c0_i32 = arith.constant 0 : i32
    %c0_i32_0 = arith.constant 0 : i32
    return %arg0, %c0_i32 : i32, i32
  }
  func.func @transform_10(%arg0: i32) -> (i32, i32) {
    %c0_i32 = arith.constant 0 : i32
    %c0_i32_0 = arith.constant 0 : i32
    return %arg0, %c0_i32 : i32, i32
  }
}

</mosaic_0001>

<llo_original>
// kernel: kma_forward.1
$region0: #{kma_forward.1}
  #allocation0 [shape = 'u32[]', space=smem, size = 0x4, offset = 0x4, fixed_abs, tag = 'smem constant byte address 0x4 - core index']
  #allocation1 [shape = 'u32[72,128]{1,0:T(1,128)}', space=vmem, size = 0x9000, scoped, tag = 'internal scratch']
  %s0 = inlined_call_operand.vmem [shape: bf16[256,128], index: 0, kind: input, shape index: {}]
  %s1 = inlined_call_operand.vmem [shape: bf16[128,64], index: 1, kind: input, shape index: {}]
  %s2 = inlined_call_operand.vmem [shape: f32[1,64], index: 2, kind: input, shape index: {}]
  %s3 = inlined_call_operand.vmem [shape: bf16[128,32], index: 3, kind: input, shape index: {}]
  %s4 = inlined_call_operand.vmem [shape: f32[1,32], index: 4, kind: input, shape index: {}]
  %s5 = inlined_call_operand.vmem [shape: bf16[2,32,64], index: 5, kind: input, shape index: {}]
  %s6 = inlined_call_operand.vmem [shape: f32[2,64], index: 6, kind: input, shape index: {}]
  %s7 = inlined_call_operand.vmem [shape: bf16[2,64,32], index: 7, kind: input, shape index: {}]
  %s8 = inlined_call_operand.vmem [shape: f32[2,32], index: 8, kind: input, shape index: {}]
  %s9 = inlined_call_operand.vmem [shape: f32[256,32], index: 9, kind: output, shape index: {0}]
  %s10 = inlined_call_operand.vmem [shape: f32[256,2], index: 10, kind: output, shape index: {1}]
  %11 = xla_tuple %s9, %s10
  %s12 = sld [smem:[#allocation0]]
  $region54: #{kma_forward.1} parent=0
    _
  %s14 = ssub.s32 1, %s12
  %s15 = scalar_select 0, %s14, %s12
  // Predicated region
  $region2: #{kma_forward.1} parent=0 // pred_check
    _
  $region3: #{kma_forward.1} parent=0 // pred_check_branch
    %17 = sbr.rel (0) target = $region5
  $region4: #{kma_forward.1} parent=0 // pred_region
    _
  $region5: #{kma_forward.1} parent=0 // pred_fallthru
    _
  // Predicated region
  $region6: #{kma_forward.1} parent=0 // pred_check
    _
  $region7: #{kma_forward.1} parent=0 // pred_check_branch
    %19 = sbr.rel (0) target = $region9
  $region8: #{kma_forward.1} parent=0 // pred_region
    _
  $region9: #{kma_forward.1} parent=0 // pred_fallthru
    _
  // Predicated region
  $region10: #{kma_forward.1} parent=0 // pred_check
    _
  $region11: #{kma_forward.1} parent=0 // pred_check_branch
    %21 = sbr.rel (0) target = $region13
  $region12: #{kma_forward.1} parent=0 // pred_region
    _
  $region13: #{kma_forward.1} parent=0 // pred_fallthru
    _
  // Predicated region
  $region14: #{kma_forward.1} parent=0 // pred_check
    _
  $region15: #{kma_forward.1} parent=0 // pred_check_branch
    %23 = sbr.rel (0) target = $region17
  $region16: #{kma_forward.1} parent=0 // pred_region
    _
  $region17: #{kma_forward.1} parent=0 // pred_fallthru
    _
  // Predicated region
  $region18: #{kma_forward.1} parent=0 // pred_check
    _
  $region19: #{kma_forward.1} parent=0 // pred_check_branch
    %25 = sbr.rel (0) target = $region21
  $region20: #{kma_forward.1} parent=0 // pred_region
    _
  $region21: #{kma_forward.1} parent=0 // pred_fallthru
    _
  // Predicated region
  $region22: #{kma_forward.1} parent=0 // pred_check
    _
  $region23: #{kma_forward.1} parent=0 // pred_check_branch
    %27 = sbr.rel (0) target = $region25
  $region24: #{kma_forward.1} parent=0 // pred_region
    _
  $region25: #{kma_forward.1} parent=0 // pred_fallthru
    _
  // Predicated region
  $region26: #{kma_forward.1} parent=0 // pred_check
    _
  $region27: #{kma_forward.1} parent=0 // pred_check_branch
    %29 = sbr.rel (0) target = $region29
  $region28: #{kma_forward.1} parent=0 // pred_region
    _
  $region29: #{kma_forward.1} parent=0 // pred_fallthru
    _
  // Predicated region
  $region30: #{kma_forward.1} parent=0 // pred_check
    _
  $region31: #{kma_forward.1} parent=0 // pred_check_branch
    %31 = sbr.rel (0) target = $region33
  $region32: #{kma_forward.1} parent=0 // pred_region
    _
  $region33: #{kma_forward.1} parent=0 // pred_fallthru
    _
  // Predicated region
  $region34: #{kma_forward.1} parent=0 // pred_check
    _
  $region35: #{kma_forward.1} parent=0 // pred_check_branch
    %33 = sbr.rel (0) target = $region37
  $region36: #{kma_forward.1} parent=0 // pred_region
    _
  $region37: #{kma_forward.1} parent=0 // pred_fallthru
    _
  %v35 = vld [vmem:[%s0] sm:$0xf]
  %v36 = vld [vmem:[%s0 + $0x4] sm:$0xf]
  %v37 = vld [vmem:[%s0 + $0x8] sm:$0xf]
  %v38 = vld [vmem:[%s0 + $0xc] sm:$0xf]
  %v39 = vld [vmem:[%s0 + $0x10] sm:$0xf]
  %v40 = vld [vmem:[%s0 + $0x14] sm:$0xf]
  %v41 = vld [vmem:[%s0 + $0x18] sm:$0xf]
  %v42 = vld [vmem:[%s0 + $0x1c] sm:$0xf]
  %v43 = vld [vmem:[%s0 + $0x20] sm:$0xf]
  %v44 = vld [vmem:[%s0 + $0x24] sm:$0xf]
  %v45 = vld [vmem:[%s0 + $0x28] sm:$0xf]
  %v46 = vld [vmem:[%s0 + $0x2c] sm:$0xf]
  %v47 = vld [vmem:[%s0 + $0x30] sm:$0xf]
  %v48 = vld [vmem:[%s0 + $0x34] sm:$0xf]
  %v49 = vld [vmem:[%s0 + $0x38] sm:$0xf]
  %v50 = vld [vmem:[%s0 + $0x3c] sm:$0xf]
  %v51 = vld [vmem:[%s0 + $0x40] sm:$0xf]
  %v52 = vld [vmem:[%s0 + $0x44] sm:$0xf]
  %v53 = vld [vmem:[%s0 + $0x48] sm:$0xf]
  %v54 = vld [vmem:[%s0 + $0x4c] sm:$0xf]
  %v55 = vld [vmem:[%s0 + $0x50] sm:$0xf]
  %v56 = vld [vmem:[%s0 + $0x54] sm:$0xf]
  %v57 = vld [vmem:[%s0 + $0x58] sm:$0xf]
  %v58 = vld [vmem:[%s0 + $0x5c] sm:$0xf]
  %v59 = vld [vmem:[%s0 + $0x60] sm:$0xf]
  %v60 = vld [vmem:[%s0 + $0x64] sm:$0xf]
  %v61 = vld [vmem:[%s0 + $0x68] sm:$0xf]
  %v62 = vld [vmem:[%s0 + $0x6c] sm:$0xf]
  %v63 = vld [vmem:[%s0 + $0x70] sm:$0xf]
  %v64 = vld [vmem:[%s0 + $0x74] sm:$0xf]
  %v65 = vld [vmem:[%s0 + $0x78] sm:$0xf]
  %v66 = vld [vmem:[%s0 + $0x7c] sm:$0xf]
  %v67 = vld [vmem:[%s1] sm:$0xf]
  %v68 = vld [vmem:[%s1 + $0x4] sm:$0xf]
  %v69 = vld [vmem:[%s1 + $0x8] sm:$0xf]
  %v70 = vld [vmem:[%s1 + $0xc] sm:$0xf]
  %v71 = vld [vmem:[%s1 + $0x10] sm:$0xf]
  %v72 = vld [vmem:[%s1 + $0x14] sm:$0xf]
  %v73 = vld [vmem:[%s1 + $0x18] sm:$0xf]
  %v74 = vld [vmem:[%s1 + $0x1c] sm:$0xf]
  %v75 = vld [vmem:[%s1 + $0x20] sm:$0xf]
  %v76 = vld [vmem:[%s1 + $0x24] sm:$0xf]
  %v77 = vld [vmem:[%s1 + $0x28] sm:$0xf]
  %v78 = vld [vmem:[%s1 + $0x2c] sm:$0xf]
  %v79 = vld [vmem:[%s1 + $0x30] sm:$0xf]
  %v80 = vld [vmem:[%s1 + $0x34] sm:$0xf]
  %v81 = vld [vmem:[%s1 + $0x38] sm:$0xf]
  %v82 = vld [vmem:[%s1 + $0x3c] sm:$0xf]
  %v83 = vld [vmem:[%s2] sm:$0x1]
  %v85 = vperm.slane %v83, 0
  %v119 = vunpack.c.l.b16 %v35
  %v120 = vunpack.c.l.b16 %v36
  %v121 = vunpack.c.l.b16 %v37
  %v122 = vunpack.c.l.b16 %v38
  %v123 = vunpack.c.l.b16 %v39
  %v124 = vunpack.c.l.b16 %v40
  %v125 = vunpack.c.l.b16 %v41
  %v126 = vunpack.c.l.b16 %v42
  %v127 = vunpack.c.l.b16 %v43
  %v128 = vunpack.c.l.b16 %v44
  %v129 = vunpack.c.l.b16 %v45
  %v130 = vunpack.c.l.b16 %v46
  %v131 = vunpack.c.l.b16 %v47
  %v132 = vunpack.c.l.b16 %v48
  %v133 = vunpack.c.l.b16 %v49
  %v134 = vunpack.c.l.b16 %v50
  %v135 = vunpack.c.l.b16 %v51
  %v136 = vunpack.c.l.b16 %v52
  %v137 = vunpack.c.l.b16 %v53
  %v138 = vunpack.c.l.b16 %v54
  %v139 = vunpack.c.l.b16 %v55
  %v140 = vunpack.c.l.b16 %v56
  %v141 = vunpack.c.l.b16 %v57
  %v142 = vunpack.c.l.b16 %v58
  %v143 = vunpack.c.l.b16 %v59
  %v144 = vunpack.c.l.b16 %v60
  %v145 = vunpack.c.l.b16 %v61
  %v146 = vunpack.c.l.b16 %v62
  %v147 = vunpack.c.l.b16 %v63
  %v148 = vunpack.c.l.b16 %v64
  %v149 = vunpack.c.l.b16 %v65
  %v150 = vunpack.c.l.b16 %v66
  %v151 = vpack.c.b16 %v120, %v119
  %v152 = vpack.c.b16 %v122, %v121
  %v153 = vpack.c.b16 %v124, %v123
  %v154 = vpack.c.b16 %v126, %v125
  %v155 = vpack.c.b16 %v128, %v127
  %v156 = vpack.c.b16 %v130, %v129
  %v157 = vpack.c.b16 %v132, %v131
  %v158 = vpack.c.b16 %v134, %v133
  %v159 = vpack.c.b16 %v136, %v135
  %v160 = vpack.c.b16 %v138, %v137
  %v161 = vpack.c.b16 %v140, %v139
  %v162 = vpack.c.b16 %v142, %v141
  %v163 = vpack.c.b16 %v144, %v143
  %v164 = vpack.c.b16 %v146, %v145
  %v165 = vpack.c.b16 %v148, %v147
  %v166 = vpack.c.b16 %v150, %v149
  %v199 = vunpack.c.l.b16 %v67
  %v200 = vunpack.c.l.b16 %v68
  %v201 = vunpack.c.l.b16 %v69
  %v202 = vunpack.c.l.b16 %v70
  %v203 = vunpack.c.l.b16 %v71
  %v204 = vunpack.c.l.b16 %v72
  %v205 = vunpack.c.l.b16 %v73
  %v206 = vunpack.c.l.b16 %v74
  %v207 = vunpack.c.l.b16 %v75
  %v208 = vunpack.c.l.b16 %v76
  %v209 = vunpack.c.l.b16 %v77
  %v210 = vunpack.c.l.b16 %v78
  %v211 = vunpack.c.l.b16 %v79
  %v212 = vunpack.c.l.b16 %v80
  %v213 = vunpack.c.l.b16 %v81
  %v214 = vunpack.c.l.b16 %v82
  %v215 = vpack.c.b16 %v200, %v199
  %v216 = vpack.c.b16 %v202, %v201
  %v217 = vpack.c.b16 %v204, %v203
  %v218 = vpack.c.b16 %v206, %v205
  %v219 = vpack.c.b16 %v208, %v207
  %v220 = vpack.c.b16 %v210, %v209
  %v221 = vpack.c.b16 %v212, %v211
  %v222 = vpack.c.b16 %v214, %v213
  %231 = vmatpush.bf16.msra.mxu0 %v222
  %232 = vmatpush.bf16.msra.mxu0 %v221
  %233 = vmatpush.bf16.msra.mxu0 %v220
  %234 = vmatpush.bf16.msra.mxu0 %v219
  %235 = vmatpush.bf16.msra.mxu0 %v218
  %236 = vmatpush.bf16.msra.mxu0 %v217
  %237 = vmatpush.bf16.msra.mxu0 %v216
  %238 = vmatpush.bf16.msra.mxu0 %v215
  %239 = vmatmul.bf16.gmra.mxu0 %v151
  %v240 = vpop.f32.mrf.mxu0
  %v241 = vadd.f32 %v85, %v240
  %v242 = vpop.f32.mrf.mxu0
  %v243 = vadd.f32 %v85, %v242
  %244 = vmatmul.bf16.gmra.mxu0 %v152
  %v245 = vpop.f32.mrf.mxu0
  %v246 = vadd.f32 %v85, %v245
  %v247 = vpop.f32.mrf.mxu0
  %v248 = vadd.f32 %v85, %v247
  %249 = vmatmul.bf16.gmra.mxu0 %v153
  %v250 = vpop.f32.mrf.mxu0
  %v251 = vadd.f32 %v85, %v250
  %v252 = vpop.f32.mrf.mxu0
  %v253 = vadd.f32 %v85, %v252
  %254 = vmatmul.bf16.gmra.mxu0 %v154
  %v255 = vpop.f32.mrf.mxu0
  %v256 = vadd.f32 %v85, %v255
  %v257 = vpop.f32.mrf.mxu0
  %v258 = vadd.f32 %v85, %v257
  %259 = vmatmul.bf16.gmra.mxu0 %v155
  %v260 = vpop.f32.mrf.mxu0
  %v261 = vadd.f32 %v85, %v260
  %v262 = vpop.f32.mrf.mxu0
  %v263 = vadd.f32 %v85, %v262
  %264 = vmatmul.bf16.gmra.mxu0 %v156
  %v265 = vpop.f32.mrf.mxu0
  %v266 = vadd.f32 %v85, %v265
  %v267 = vpop.f32.mrf.mxu0
  %v268 = vadd.f32 %v85, %v267
  %269 = vmatmul.bf16.gmra.mxu0 %v157
  %v270 = vpop.f32.mrf.mxu0
  %v271 = vadd.f32 %v85, %v270
  %v272 = vpop.f32.mrf.mxu0
  %v273 = vadd.f32 %v85, %v272
  %274 = vmatmul.bf16.gmra.mxu0 %v158
  %v275 = vpop.f32.mrf.mxu0
  %v276 = vadd.f32 %v85, %v275
  %v277 = vpop.f32.mrf.mxu0
  %v278 = vadd.f32 %v85, %v277
  %279 = vmatmul.bf16.gmra.mxu0 %v159
  %v280 = vpop.f32.mrf.mxu0
  %v281 = vadd.f32 %v85, %v280
  %v282 = vpop.f32.mrf.mxu0
  %v283 = vadd.f32 %v85, %v282
  %284 = vmatmul.bf16.gmra.mxu0 %v160
  %v285 = vpop.f32.mrf.mxu0
  %v286 = vadd.f32 %v85, %v285
  %v287 = vpop.f32.mrf.mxu0
  %v288 = vadd.f32 %v85, %v287
  %289 = vmatmul.bf16.gmra.mxu0 %v161
  %v290 = vpop.f32.mrf.mxu0
  %v291 = vadd.f32 %v85, %v290
  %v292 = vpop.f32.mrf.mxu0
  %v293 = vadd.f32 %v85, %v292
  %294 = vmatmul.bf16.gmra.mxu0 %v162
  %v295 = vpop.f32.mrf.mxu0
  %v296 = vadd.f32 %v85, %v295
  %v297 = vpop.f32.mrf.mxu0
  %v298 = vadd.f32 %v85, %v297
  %299 = vmatmul.bf16.gmra.mxu0 %v163
  %v300 = vpop.f32.mrf.mxu0
  %v301 = vadd.f32 %v85, %v300
  %v302 = vpop.f32.mrf.mxu0
  %v303 = vadd.f32 %v85, %v302
  %304 = vmatmul.bf16.gmra.mxu0 %v164
  %v305 = vpop.f32.mrf.mxu0
  %v306 = vadd.f32 %v85, %v305
  %v307 = vpop.f32.mrf.mxu0
  %v308 = vadd.f32 %v85, %v307
  %309 = vmatmul.bf16.gmra.mxu0 %v165
  %v310 = vpop.f32.mrf.mxu0
  %v311 = vadd.f32 %v85, %v310
  %v312 = vpop.f32.mrf.mxu0
  %v313 = vadd.f32 %v85, %v312
  %314 = vmatmul.bf16.gmra.mxu0 %v166
  %v315 = vpop.f32.mrf.mxu0
  %v316 = vadd.f32 %v85, %v315
  %v317 = vpop.f32.mrf.mxu0
  %v318 = vadd.f32 %v85, %v317
  %319 = vdwg.mxu0
  %v320 = vpack.c.bf16 %v241, %v241
  %v321 = vpack.c.bf16 %v243, %v243
  %v322 = vpack.c.bf16 %v246, %v246
  %v323 = vpack.c.bf16 %v248, %v248
  %v324 = vpack.c.bf16 %v251, %v251
  %v325 = vpack.c.bf16 %v253, %v253
  %v326 = vpack.c.bf16 %v256, %v256
  %v327 = vpack.c.bf16 %v258, %v258
  %v328 = vpack.c.bf16 %v261, %v261
  %v329 = vpack.c.bf16 %v263, %v263
  %v330 = vpack.c.bf16 %v266, %v266
  %v331 = vpack.c.bf16 %v268, %v268
  %v332 = vpack.c.bf16 %v271, %v271
  %v333 = vpack.c.bf16 %v273, %v273
  %v334 = vpack.c.bf16 %v276, %v276
  %v335 = vpack.c.bf16 %v278, %v278
  %v336 = vpack.c.bf16 %v281, %v281
  %v337 = vpack.c.bf16 %v283, %v283
  %v338 = vpack.c.bf16 %v286, %v286
  %v339 = vpack.c.bf16 %v288, %v288
  %v340 = vpack.c.bf16 %v291, %v291
  %v341 = vpack.c.bf16 %v293, %v293
  %v342 = vpack.c.bf16 %v296, %v296
  %v343 = vpack.c.bf16 %v298, %v298
  %v344 = vpack.c.bf16 %v301, %v301
  %v345 = vpack.c.bf16 %v303, %v303
  %v346 = vpack.c.bf16 %v306, %v306
  %v347 = vpack.c.bf16 %v308, %v308
  %v348 = vpack.c.bf16 %v311, %v311
  %v349 = vpack.c.bf16 %v313, %v313
  %v350 = vpack.c.bf16 %v316, %v316
  %v351 = vpack.c.bf16 %v318, %v318
  %v352 = vld [vmem:[%s3] sm:$0xf]
  %v353 = vld [vmem:[%s3 + $0x4] sm:$0xf]
  %v354 = vld [vmem:[%s3 + $0x8] sm:$0xf]
  %v355 = vld [vmem:[%s3 + $0xc] sm:$0xf]
  %v356 = vld [vmem:[%s3 + $0x10] sm:$0xf]
  %v357 = vld [vmem:[%s3 + $0x14] sm:$0xf]
  %v358 = vld [vmem:[%s3 + $0x18] sm:$0xf]
  %v359 = vld [vmem:[%s3 + $0x1c] sm:$0xf]
  %v360 = vld [vmem:[%s3 + $0x20] sm:$0xf]
  %v361 = vld [vmem:[%s3 + $0x24] sm:$0xf]
  %v362 = vld [vmem:[%s3 + $0x28] sm:$0xf]
  %v363 = vld [vmem:[%s3 + $0x2c] sm:$0xf]
  %v364 = vld [vmem:[%s3 + $0x30] sm:$0xf]
  %v365 = vld [vmem:[%s3 + $0x34] sm:$0xf]
  %v366 = vld [vmem:[%s3 + $0x38] sm:$0xf]
  %v367 = vld [vmem:[%s3 + $0x3c] sm:$0xf]
  %v368 = vld [vmem:[%s4] sm:$0x1]
  %v370 = vperm.slane %v368, 0
  %v388 = vunpack.c.l.b16 %v352
  %v389 = vunpack.c.l.b16 %v353
  %v390 = vunpack.c.l.b16 %v354
  %v391 = vunpack.c.l.b16 %v355
  %v392 = vunpack.c.l.b16 %v356
  %v393 = vunpack.c.l.b16 %v357
  %v394 = vunpack.c.l.b16 %v358
  %v395 = vunpack.c.l.b16 %v359
  %v396 = vunpack.c.l.b16 %v360
  %v397 = vunpack.c.l.b16 %v361
  %v398 = vunpack.c.l.b16 %v362
  %v399 = vunpack.c.l.b16 %v363
  %v400 = vunpack.c.l.b16 %v364
  %v401 = vunpack.c.l.b16 %v365
  %v402 = vunpack.c.l.b16 %v366
  %v403 = vunpack.c.l.b16 %v367
  %v404 = vpack.c.b16 %v389, %v388
  %v405 = vpack.c.b16 %v391, %v390
  %v406 = vpack.c.b16 %v393, %v392
  %v407 = vpack.c.b16 %v395, %v394
  %v408 = vpack.c.b16 %v397, %v396
  %v409 = vpack.c.b16 %v399, %v398
  %v410 = vpack.c.b16 %v401, %v400
  %v411 = vpack.c.b16 %v403, %v402
  %420 = vmatpush.bf16.msra.mxu0 %v411
  %421 = vmatpush.bf16.msra.mxu0 %v410
  %422 = vmatpush.bf16.msra.mxu0 %v409
  %423 = vmatpush.bf16.msra.mxu0 %v408
  %424 = vmatpush.bf16.msra.mxu0 %v407
  %425 = vmatpush.bf16.msra.mxu0 %v406
  %426 = vmatpush.bf16.msra.mxu0 %v405
  %427 = vmatpush.bf16.msra.mxu0 %v404
  %428 = vmatmul.bf16.gmra.mxu0 %v151
  %v429 = vpop.f32.mrf.mxu0
  %v430 = vadd.f32 %v370, %v429
  %v431 = vpop.f32.mrf.mxu0
  %v432 = vadd.f32 %v370, %v431
  %433 = vmatmul.bf16.gmra.mxu0 %v152
  %v434 = vpop.f32.mrf.mxu0
  %v435 = vadd.f32 %v370, %v434
  %v436 = vpop.f32.mrf.mxu0
  %v437 = vadd.f32 %v370, %v436
  %438 = vmatmul.bf16.gmra.mxu0 %v153
  %v439 = vpop.f32.mrf.mxu0
  %v440 = vadd.f32 %v370, %v439
  %v441 = vpop.f32.mrf.mxu0
  %v442 = vadd.f32 %v370, %v441
  %443 = vmatmul.bf16.gmra.mxu0 %v154
  %v444 = vpop.f32.mrf.mxu0
  %v445 = vadd.f32 %v370, %v444
  %v446 = vpop.f32.mrf.mxu0
  %v447 = vadd.f32 %v370, %v446
  %448 = vmatmul.bf16.gmra.mxu0 %v155
  %v449 = vpop.f32.mrf.mxu0
  %v450 = vadd.f32 %v370, %v449
  %v451 = vpop.f32.mrf.mxu0
  %v452 = vadd.f32 %v370, %v451
  %453 = vmatmul.bf16.gmra.mxu0 %v156
  %v454 = vpop.f32.mrf.mxu0
  %v455 = vadd.f32 %v370, %v454
  %v456 = vpop.f32.mrf.mxu0
  %v457 = vadd.f32 %v370, %v456
  %458 = vmatmul.bf16.gmra.mxu0 %v157
  %v459 = vpop.f32.mrf.mxu0
  %v460 = vadd.f32 %v370, %v459
  %v461 = vpop.f32.mrf.mxu0
  %v462 = vadd.f32 %v370, %v461
  %463 = vmatmul.bf16.gmra.mxu0 %v158
  %v464 = vpop.f32.mrf.mxu0
  %v465 = vadd.f32 %v370, %v464
  %v466 = vpop.f32.mrf.mxu0
  %v467 = vadd.f32 %v370, %v466
  %468 = vmatmul.bf16.gmra.mxu0 %v159
  %v469 = vpop.f32.mrf.mxu0
  %v470 = vadd.f32 %v370, %v469
  %v471 = vpop.f32.mrf.mxu0
  %v472 = vadd.f32 %v370, %v471
  %473 = vmatmul.bf16.gmra.mxu0 %v160
  %v474 = vpop.f32.mrf.mxu0
  %v475 = vadd.f32 %v370, %v474
  %v476 = vpop.f32.mrf.mxu0
  %v477 = vadd.f32 %v370, %v476
  %478 = vmatmul.bf16.gmra.mxu0 %v161
  %v479 = vpop.f32.mrf.mxu0
  %v480 = vadd.f32 %v370, %v479
  %v481 = vpop.f32.mrf.mxu0
  %v482 = vadd.f32 %v370, %v481
  %483 = vmatmul.bf16.gmra.mxu0 %v162
  %v484 = vpop.f32.mrf.mxu0
  %v485 = vadd.f32 %v370, %v484
  %v486 = vpop.f32.mrf.mxu0
  %v487 = vadd.f32 %v370, %v486
  %488 = vmatmul.bf16.gmra.mxu0 %v163
  %v489 = vpop.f32.mrf.mxu0
  %v490 = vadd.f32 %v370, %v489
  %v491 = vpop.f32.mrf.mxu0
  %v492 = vadd.f32 %v370, %v491
  %493 = vmatmul.bf16.gmra.mxu0 %v164
  %v494 = vpop.f32.mrf.mxu0
  %v495 = vadd.f32 %v370, %v494
  %v496 = vpop.f32.mrf.mxu0
  %v497 = vadd.f32 %v370, %v496
  %498 = vmatmul.bf16.gmra.mxu0 %v165
  %v499 = vpop.f32.mrf.mxu0
  %v500 = vadd.f32 %v370, %v499
  %v501 = vpop.f32.mrf.mxu0
  %v502 = vadd.f32 %v370, %v501
  %503 = vmatmul.bf16.gmra.mxu0 %v166
  %v504 = vpop.f32.mrf.mxu0
  %v505 = vadd.f32 %v370, %v504
  %v506 = vpop.f32.mrf.mxu0
  %v507 = vadd.f32 %v370, %v506
  %508 = vdwg.mxu0
  %v509 = vld [vmem:[%s5] sm:$0xf]
  %v510 = vld [vmem:[%s5 + $0x4] sm:$0xf]
  %v511 = vld [vmem:[%s5 + $0x8] sm:$0xf]
  %v512 = vld [vmem:[%s5 + $0xc] sm:$0xf]
  %v513 = vld [vmem:[%s5 + $0x10] sm:$0xf]
  %v514 = vld [vmem:[%s5 + $0x14] sm:$0xf]
  %v515 = vld [vmem:[%s5 + $0x18] sm:$0xf]
  %v516 = vld [vmem:[%s5 + $0x1c] sm:$0xf]
  %v517 = vld [vmem:[%s7] sm:$0xf]
  %v518 = vld [vmem:[%s7 + $0x4] sm:$0xf]
  %v519 = vld [vmem:[%s7 + $0x8] sm:$0xf]
  %v520 = vld [vmem:[%s7 + $0xc] sm:$0xf]
  %v521 = vld [vmem:[%s7 + $0x10] sm:$0xf]
  %v522 = vld [vmem:[%s7 + $0x14] sm:$0xf]
  %v523 = vld [vmem:[%s7 + $0x18] sm:$0xf]
  %v524 = vld [vmem:[%s7 + $0x1c] sm:$0xf]
  %v525 = vld [vmem:[%s7 + $0x20] sm:$0xf]
  %v526 = vld [vmem:[%s7 + $0x24] sm:$0xf]
  %v527 = vld [vmem:[%s7 + $0x28] sm:$0xf]
  %v528 = vld [vmem:[%s7 + $0x2c] sm:$0xf]
  %v529 = vld [vmem:[%s7 + $0x30] sm:$0xf]
  %v530 = vld [vmem:[%s7 + $0x34] sm:$0xf]
  %v531 = vld [vmem:[%s7 + $0x38] sm:$0xf]
  %v532 = vld [vmem:[%s7 + $0x3c] sm:$0xf]
  %v533 = vld [vmem:[%s6] sm:$0x3]
  %v534 = vld [vmem:[%s8] sm:$0x3]
  %v535 = vperm.slane %v533, 0
  %v568 = vunpack.c.l.b16 %v320
  %v569 = vunpack.c.l.b16 %v321
  %v570 = vunpack.c.l.b16 %v322
  %v571 = vunpack.c.l.b16 %v323
  %v572 = vunpack.c.l.b16 %v324
  %v573 = vunpack.c.l.b16 %v325
  %v574 = vunpack.c.l.b16 %v326
  %v575 = vunpack.c.l.b16 %v327
  %v576 = vunpack.c.l.b16 %v328
  %v577 = vunpack.c.l.b16 %v329
  %v578 = vunpack.c.l.b16 %v330
  %v579 = vunpack.c.l.b16 %v331
  %v580 = vunpack.c.l.b16 %v332
  %v581 = vunpack.c.l.b16 %v333
  %v582 = vunpack.c.l.b16 %v334
  %v583 = vunpack.c.l.b16 %v335
  %v584 = vunpack.c.l.b16 %v336
  %v585 = vunpack.c.l.b16 %v337
  %v586 = vunpack.c.l.b16 %v338
  %v587 = vunpack.c.l.b16 %v339
  %v588 = vunpack.c.l.b16 %v340
  %v589 = vunpack.c.l.b16 %v341
  %v590 = vunpack.c.l.b16 %v342
  %v591 = vunpack.c.l.b16 %v343
  %v592 = vunpack.c.l.b16 %v344
  %v593 = vunpack.c.l.b16 %v345
  %v594 = vunpack.c.l.b16 %v346
  %v595 = vunpack.c.l.b16 %v347
  %v596 = vunpack.c.l.b16 %v348
  %v597 = vunpack.c.l.b16 %v349
  %v598 = vunpack.c.l.b16 %v350
  %v599 = vunpack.c.l.b16 %v351
  %v600 = vpack.c.b16 %v569, %v568
  %v601 = vpack.c.b16 %v571, %v570
  %v602 = vpack.c.b16 %v573, %v572
  %v603 = vpack.c.b16 %v575, %v574
  %v604 = vpack.c.b16 %v577, %v576
  %v605 = vpack.c.b16 %v579, %v578
  %v606 = vpack.c.b16 %v581, %v580
  %v607 = vpack.c.b16 %v583, %v582
  %v608 = vpack.c.b16 %v585, %v584
  %v609 = vpack.c.b16 %v587, %v586
  %v610 = vpack.c.b16 %v589, %v588
  %v611 = vpack.c.b16 %v591, %v590
  %v612 = vpack.c.b16 %v593, %v592
  %v613 = vpack.c.b16 %v595, %v594
  %v614 = vpack.c.b16 %v597, %v596
  %v615 = vpack.c.b16 %v599, %v598
  %v620 = vunpack.c.l.b16 %v509
  %v621 = vunpack.c.l.b16 %v510
  %v622 = vunpack.c.l.b16 %v511
  %v623 = vunpack.c.l.b16 %v512
  %v624 = vpack.c.b16 %v621, %v620
  %v625 = vpack.c.b16 %v623, %v622
  %vm628 = vcmask 261120
  %v630 = vsel %vm628, %v600, 0
  %v633 = vsel %vm628, %v601, 0
  %v636 = vsel %vm628, %v602, 0
  %v639 = vsel %vm628, %v603, 0
  %v642 = vsel %vm628, %v604, 0
  %v645 = vsel %vm628, %v605, 0
  %v648 = vsel %vm628, %v606, 0
  %v651 = vsel %vm628, %v607, 0
  %v654 = vsel %vm628, %v608, 0
  %v657 = vsel %vm628, %v609, 0
  %v660 = vsel %vm628, %v610, 0
  %v663 = vsel %vm628, %v611, 0
  %v666 = vsel %vm628, %v612, 0
  %v669 = vsel %vm628, %v613, 0
  %v672 = vsel %vm628, %v614, 0
  %v675 = vsel %vm628, %v615, 0
  %677 = vmatpush.bf16.msra.mxu0 0
  %678 = vmatpush.bf16.msra.mxu0 0
  %679 = vmatpush.bf16.msra.mxu0 0
  %680 = vmatpush.bf16.msra.mxu0 0
  %681 = vmatpush.bf16.msra.mxu0 0
  %682 = vmatpush.bf16.msra.mxu0 0
  %683 = vmatpush.bf16.msra.mxu0 %v625
  %684 = vmatpush.bf16.msra.mxu0 %v624
  %685 = vmatmul.bf16.gmra.mxu0 %v630
  %v686 = vpop.f32.mrf.mxu0
  %v687 = vadd.f32 %v535, %v686
  %v688 = vpop.f32.mrf.mxu0
  %v689 = vadd.f32 %v535, %v688
  %690 = vmatmul.bf16.gmra.mxu0 %v633
  %v691 = vpop.f32.mrf.mxu0
  %v692 = vadd.f32 %v535, %v691
  %v693 = vpop.f32.mrf.mxu0
  %v694 = vadd.f32 %v535, %v693
  %695 = vmatmul.bf16.gmra.mxu0 %v636
  %v696 = vpop.f32.mrf.mxu0
  %v697 = vadd.f32 %v535, %v696
  %v698 = vpop.f32.mrf.mxu0
  %v699 = vadd.f32 %v535, %v698
  %700 = vmatmul.bf16.gmra.mxu0 %v639
  %v701 = vpop.f32.mrf.mxu0
  %v702 = vadd.f32 %v535, %v701
  %v703 = vpop.f32.mrf.mxu0
  %v704 = vadd.f32 %v535, %v703
  %705 = vmatmul.bf16.gmra.mxu0 %v642
  %v706 = vpop.f32.mrf.mxu0
  %v707 = vadd.f32 %v535, %v706
  %v708 = vpop.f32.mrf.mxu0
  %v709 = vadd.f32 %v535, %v708
  %710 = vmatmul.bf16.gmra.mxu0 %v645
  %v711 = vpop.f32.mrf.mxu0
  %v712 = vadd.f32 %v535, %v711
  %v713 = vpop.f32.mrf.mxu0
  %v714 = vadd.f32 %v535, %v713
  %715 = vmatmul.bf16.gmra.mxu0 %v648
  %v716 = vpop.f32.mrf.mxu0
  %v717 = vadd.f32 %v535, %v716
  %v718 = vpop.f32.mrf.mxu0
  %v719 = vadd.f32 %v535, %v718
  %720 = vmatmul.bf16.gmra.mxu0 %v651
  %v721 = vpop.f32.mrf.mxu0
  %v722 = vadd.f32 %v535, %v721
  %v723 = vpop.f32.mrf.mxu0
  %v724 = vadd.f32 %v535, %v723
  %725 = vmatmul.bf16.gmra.mxu0 %v654
  %v726 = vpop.f32.mrf.mxu0
  %v727 = vadd.f32 %v535, %v726
  %v728 = vpop.f32.mrf.mxu0
  %v729 = vadd.f32 %v535, %v728
  %730 = vmatmul.bf16.gmra.mxu0 %v657
  %v731 = vpop.f32.mrf.mxu0
  %v732 = vadd.f32 %v535, %v731
  %v733 = vpop.f32.mrf.mxu0
  %v734 = vadd.f32 %v535, %v733
  %735 = vmatmul.bf16.gmra.mxu0 %v660
  %v736 = vpop.f32.mrf.mxu0
  %v737 = vadd.f32 %v535, %v736
  %v738 = vpop.f32.mrf.mxu0
  %v739 = vadd.f32 %v535, %v738
  %740 = vmatmul.bf16.gmra.mxu0 %v663
  %v741 = vpop.f32.mrf.mxu0
  %v742 = vadd.f32 %v535, %v741
  %v743 = vpop.f32.mrf.mxu0
  %v744 = vadd.f32 %v535, %v743
  %745 = vmatmul.bf16.gmra.mxu0 %v666
  %v746 = vpop.f32.mrf.mxu0
  %v747 = vadd.f32 %v535, %v746
  %v748 = vpop.f32.mrf.mxu0
  %v749 = vadd.f32 %v535, %v748
  %750 = vmatmul.bf16.gmra.mxu0 %v669
  %v751 = vpop.f32.mrf.mxu0
  %v752 = vadd.f32 %v535, %v751
  %v753 = vpop.f32.mrf.mxu0
  %v754 = vadd.f32 %v535, %v753
  %755 = vmatmul.bf16.gmra.mxu0 %v672
  %v756 = vpop.f32.mrf.mxu0
  %v757 = vadd.f32 %v535, %v756
  %v758 = vpop.f32.mrf.mxu0
  %v759 = vadd.f32 %v535, %v758
  %760 = vmatmul.bf16.gmra.mxu0 %v675
  %v761 = vpop.f32.mrf.mxu0
  %v762 = vadd.f32 %v535, %v761
  %v763 = vpop.f32.mrf.mxu0
  %v764 = vadd.f32 %v535, %v763
  %765 = vdwg.mxu0
  %v766 = vmax.f32 %v687, 0.0
  %v767 = vmax.f32 %v689, 0.0
  %v768 = vmax.f32 %v692, 0.0
  %v769 = vmax.f32 %v694, 0.0
  %v770 = vmax.f32 %v697, 0.0
  %v771 = vmax.f32 %v699, 0.0
  %v772 = vmax.f32 %v702, 0.0
  %v773 = vmax.f32 %v704, 0.0
  %v774 = vmax.f32 %v707, 0.0
  %v775 = vmax.f32 %v709, 0.0
  %v776 = vmax.f32 %v712, 0.0
  %v777 = vmax.f32 %v714, 0.0
  %v778 = vmax.f32 %v717, 0.0
  %v779 = vmax.f32 %v719, 0.0
  %v780 = vmax.f32 %v722, 0.0
  %v781 = vmax.f32 %v724, 0.0
  %v782 = vmax.f32 %v727, 0.0
  %v783 = vmax.f32 %v729, 0.0
  %v784 = vmax.f32 %v732, 0.0
  %v785 = vmax.f32 %v734, 0.0
  %v786 = vmax.f32 %v737, 0.0
  %v787 = vmax.f32 %v739, 0.0
  %v788 = vmax.f32 %v742, 0.0
  %v789 = vmax.f32 %v744, 0.0
  %v790 = vmax.f32 %v747, 0.0
  %v791 = vmax.f32 %v749, 0.0
  %v792 = vmax.f32 %v752, 0.0
  %v793 = vmax.f32 %v754, 0.0
  %v794 = vmax.f32 %v757, 0.0
  %v795 = vmax.f32 %v759, 0.0
  %v796 = vmax.f32 %v762, 0.0
  %v797 = vmax.f32 %v764, 0.0
  %v798 = vpack.c.bf16 %v767, %v766
  %v799 = vpack.c.bf16 %v769, %v768
  %v800 = vpack.c.bf16 %v771, %v770
  %v801 = vpack.c.bf16 %v773, %v772
  %v802 = vpack.c.bf16 %v775, %v774
  %v803 = vpack.c.bf16 %v777, %v776
  %v804 = vpack.c.bf16 %v779, %v778
  %v805 = vpack.c.bf16 %v781, %v780
  %v806 = vpack.c.bf16 %v783, %v782
  %v807 = vpack.c.bf16 %v785, %v784
  %v808 = vpack.c.bf16 %v787, %v786
  %v809 = vpack.c.bf16 %v789, %v788
  %v810 = vpack.c.bf16 %v791, %v790
  %v811 = vpack.c.bf16 %v793, %v792
  %v812 = vpack.c.bf16 %v795, %v794
  %v813 = vpack.c.bf16 %v797, %v796
  %v814 = vperm.slane %v534, 0
  %v823 = vunpack.c.l.b16 %v517
  %v824 = vunpack.c.l.b16 %v518
  %v825 = vunpack.c.l.b16 %v519
  %v826 = vunpack.c.l.b16 %v520
  %v827 = vunpack.c.l.b16 %v521
  %v828 = vunpack.c.l.b16 %v522
  %v829 = vunpack.c.l.b16 %v523
  %v830 = vunpack.c.l.b16 %v524
  %v831 = vpack.c.b16 %v824, %v823
  %v832 = vpack.c.b16 %v826, %v825
  %v833 = vpack.c.b16 %v828, %v827
  %v834 = vpack.c.b16 %v830, %v829
  %vm839 = vcmask 523264
  %v841 = vsel %vm839, %v798, 0
  %v844 = vsel %vm839, %v799, 0
  %v847 = vsel %vm839, %v800, 0
  %v850 = vsel %vm839, %v801, 0
  %v853 = vsel %vm839, %v802, 0
  %v856 = vsel %vm839, %v803, 0
  %v859 = vsel %vm839, %v804, 0
  %v862 = vsel %vm839, %v805, 0
  %v865 = vsel %vm839, %v806, 0
  %v868 = vsel %vm839, %v807, 0
  %v871 = vsel %vm839, %v808, 0
  %v874 = vsel %vm839, %v809, 0
  %v877 = vsel %vm839, %v810, 0
  %v880 = vsel %vm839, %v811, 0
  %v883 = vsel %vm839, %v812, 0
  %v886 = vsel %vm839, %v813, 0
  %888 = vmatpush.bf16.msra.mxu0 0
  %889 = vmatpush.bf16.msra.mxu0 0
  %890 = vmatpush.bf16.msra.mxu0 0
  %891 = vmatpush.bf16.msra.mxu0 0
  %892 = vmatpush.bf16.msra.mxu0 %v834
  %893 = vmatpush.bf16.msra.mxu0 %v833
  %894 = vmatpush.bf16.msra.mxu0 %v832
  %895 = vmatpush.bf16.msra.mxu0 %v831
  %896 = vmatmul.bf16.gmra.mxu0 %v841
  %v897 = vpop.f32.mrf.mxu0
  %v898 = vadd.f32 %v814, %v897
  %v899 = vpop.f32.mrf.mxu0
  %v900 = vadd.f32 %v814, %v899
  %901 = vmatmul.bf16.gmra.mxu0 %v844
  %v902 = vpop.f32.mrf.mxu0
  %v903 = vadd.f32 %v814, %v902
  %v904 = vpop.f32.mrf.mxu0
  %v905 = vadd.f32 %v814, %v904
  %906 = vmatmul.bf16.gmra.mxu0 %v847
  %v907 = vpop.f32.mrf.mxu0
  %v908 = vadd.f32 %v814, %v907
  %v909 = vpop.f32.mrf.mxu0
  %v910 = vadd.f32 %v814, %v909
  %911 = vmatmul.bf16.gmra.mxu0 %v850
  %v912 = vpop.f32.mrf.mxu0
  %v913 = vadd.f32 %v814, %v912
  %v914 = vpop.f32.mrf.mxu0
  %v915 = vadd.f32 %v814, %v914
  %916 = vmatmul.bf16.gmra.mxu0 %v853
  %v917 = vpop.f32.mrf.mxu0
  %v918 = vadd.f32 %v814, %v917
  %v919 = vpop.f32.mrf.mxu0
  %v920 = vadd.f32 %v814, %v919
  %921 = vmatmul.bf16.gmra.mxu0 %v856
  %v922 = vpop.f32.mrf.mxu0
  %v923 = vadd.f32 %v814, %v922
  %v924 = vpop.f32.mrf.mxu0
  %v925 = vadd.f32 %v814, %v924
  %926 = vmatmul.bf16.gmra.mxu0 %v859
  %v927 = vpop.f32.mrf.mxu0
  %v928 = vadd.f32 %v814, %v927
  %v929 = vpop.f32.mrf.mxu0
  %v930 = vadd.f32 %v814, %v929
  %931 = vmatmul.bf16.gmra.mxu0 %v862
  %v932 = vpop.f32.mrf.mxu0
  %v933 = vadd.f32 %v814, %v932
  %v934 = vpop.f32.mrf.mxu0
  %v935 = vadd.f32 %v814, %v934
  %936 = vmatmul.bf16.gmra.mxu0 %v865
  %v937 = vpop.f32.mrf.mxu0
  %v938 = vadd.f32 %v814, %v937
  %v939 = vpop.f32.mrf.mxu0
  %v940 = vadd.f32 %v814, %v939
  %941 = vmatmul.bf16.gmra.mxu0 %v868
  %v942 = vpop.f32.mrf.mxu0
  %v943 = vadd.f32 %v814, %v942
  %v944 = vpop.f32.mrf.mxu0
  %v945 = vadd.f32 %v814, %v944
  %946 = vmatmul.bf16.gmra.mxu0 %v871
  %v947 = vpop.f32.mrf.mxu0
  %v948 = vadd.f32 %v814, %v947
  %v949 = vpop.f32.mrf.mxu0
  %v950 = vadd.f32 %v814, %v949
  %951 = vmatmul.bf16.gmra.mxu0 %v874
  %v952 = vpop.f32.mrf.mxu0
  %v953 = vadd.f32 %v814, %v952
  %v954 = vpop.f32.mrf.mxu0
  %v955 = vadd.f32 %v814, %v954
  %956 = vmatmul.bf16.gmra.mxu0 %v877
  %v957 = vpop.f32.mrf.mxu0
  %v958 = vadd.f32 %v814, %v957
  %v959 = vpop.f32.mrf.mxu0
  %v960 = vadd.f32 %v814, %v959
  %961 = vmatmul.bf16.gmra.mxu0 %v880
  %v962 = vpop.f32.mrf.mxu0
  %v963 = vadd.f32 %v814, %v962
  %v964 = vpop.f32.mrf.mxu0
  %v965 = vadd.f32 %v814, %v964
  %966 = vmatmul.bf16.gmra.mxu0 %v883
  %v967 = vpop.f32.mrf.mxu0
  %v968 = vadd.f32 %v814, %v967
  %v969 = vpop.f32.mrf.mxu0
  %v970 = vadd.f32 %v814, %v969
  %971 = vmatmul.bf16.gmra.mxu0 %v886
  %v972 = vpop.f32.mrf.mxu0
  %v973 = vadd.f32 %v814, %v972
  %v974 = vpop.f32.mrf.mxu0
  %v975 = vadd.f32 %v814, %v974
  %976 = vdwg.mxu0
  %v977 = vmul.f32 %v898, %v430
  %v978 = vmul.f32 %v900, %v432
  %v979 = vmul.f32 %v903, %v435
  %v980 = vmul.f32 %v905, %v437
  %v981 = vmul.f32 %v908, %v440
  %v982 = vmul.f32 %v910, %v442
  %v983 = vmul.f32 %v913, %v445
  %v984 = vmul.f32 %v915, %v447
  %v985 = vmul.f32 %v918, %v450
  %v986 = vmul.f32 %v920, %v452
  %v987 = vmul.f32 %v923, %v455
  %v988 = vmul.f32 %v925, %v457
  %v989 = vmul.f32 %v928, %v460
  %v990 = vmul.f32 %v930, %v462
  %v991 = vmul.f32 %v933, %v465
  %v992 = vmul.f32 %v935, %v467
  %v993 = vmul.f32 %v938, %v470
  %v994 = vmul.f32 %v940, %v472
  %v995 = vmul.f32 %v943, %v475
  %v996 = vmul.f32 %v945, %v477
  %v997 = vmul.f32 %v948, %v480
  %v998 = vmul.f32 %v950, %v482
  %v999 = vmul.f32 %v953, %v485
  %v1000 = vmul.f32 %v955, %v487
  %v1001 = vmul.f32 %v958, %v490
  %v1002 = vmul.f32 %v960, %v492
  %v1003 = vmul.f32 %v963, %v495
  %v1004 = vmul.f32 %v965, %v497
  %v1005 = vmul.f32 %v968, %v500
  %v1006 = vmul.f32 %v970, %v502
  %v1007 = vmul.f32 %v973, %v505
  %v1008 = vmul.f32 %v975, %v507
  %v1009 = vsel %vm628, %v977, 0.0
  %1010 = vadd.xlane.f32.xlu0 %v1009
  %v1011 = vpop.xlane.xlu0 %1010
  %v1012 = vsel %vm628, %v978, 0.0
  %1013 = vadd.xlane.f32.xlu0 %v1012
  %v1014 = vpop.xlane.xlu0 %1013
  %v1015 = vsel %vm628, %v979, 0.0
  %1016 = vadd.xlane.f32.xlu0 %v1015
  %v1017 = vpop.xlane.xlu0 %1016
  %v1018 = vsel %vm628, %v980, 0.0
  %1019 = vadd.xlane.f32.xlu0 %v1018
  %v1020 = vpop.xlane.xlu0 %1019
  %v1021 = vsel %vm628, %v981, 0.0
  %1022 = vadd.xlane.f32.xlu0 %v1021
  %v1023 = vpop.xlane.xlu0 %1022
  %v1024 = vsel %vm628, %v982, 0.0
  %1025 = vadd.xlane.f32.xlu0 %v1024
  %v1026 = vpop.xlane.xlu0 %1025
  %v1027 = vsel %vm628, %v983, 0.0
  %1028 = vadd.xlane.f32.xlu0 %v1027
  %v1029 = vpop.xlane.xlu0 %1028
  %v1030 = vsel %vm628, %v984, 0.0
  %1031 = vadd.xlane.f32.xlu0 %v1030
  %v1032 = vpop.xlane.xlu0 %1031
  %v1033 = vsel %vm628, %v985, 0.0
  %1034 = vadd.xlane.f32.xlu0 %v1033
  %v1035 = vpop.xlane.xlu0 %1034
  %v1036 = vsel %vm628, %v986, 0.0
  %1037 = vadd.xlane.f32.xlu0 %v1036
  %v1038 = vpop.xlane.xlu0 %1037
  %v1039 = vsel %vm628, %v987, 0.0
  %1040 = vadd.xlane.f32.xlu0 %v1039
  %v1041 = vpop.xlane.xlu0 %1040
  %v1042 = vsel %vm628, %v988, 0.0
  %1043 = vadd.xlane.f32.xlu0 %v1042
  %v1044 = vpop.xlane.xlu0 %1043
  %v1045 = vsel %vm628, %v989, 0.0
  %1046 = vadd.xlane.f32.xlu0 %v1045
  %v1047 = vpop.xlane.xlu0 %1046
  %v1048 = vsel %vm628, %v990, 0.0
  %1049 = vadd.xlane.f32.xlu0 %v1048
  %v1050 = vpop.xlane.xlu0 %1049
  %v1051 = vsel %vm628, %v991, 0.0
  %1052 = vadd.xlane.f32.xlu0 %v1051
  %v1053 = vpop.xlane.xlu0 %1052
  %v1054 = vsel %vm628, %v992, 0.0
  %1055 = vadd.xlane.f32.xlu0 %v1054
  %v1056 = vpop.xlane.xlu0 %1055
  %v1057 = vsel %vm628, %v993, 0.0
  %1058 = vadd.xlane.f32.xlu0 %v1057
  %v1059 = vpop.xlane.xlu0 %1058
  %v1060 = vsel %vm628, %v994, 0.0
  %1061 = vadd.xlane.f32.xlu0 %v1060
  %v1062 = vpop.xlane.xlu0 %1061
  %v1063 = vsel %vm628, %v995, 0.0
  %1064 = vadd.xlane.f32.xlu0 %v1063
  %v1065 = vpop.xlane.xlu0 %1064
  %v1066 = vsel %vm628, %v996, 0.0
  %1067 = vadd.xlane.f32.xlu0 %v1066
  %v1068 = vpop.xlane.xlu0 %1067
  %v1069 = vsel %vm628, %v997, 0.0
  %1070 = vadd.xlane.f32.xlu0 %v1069
  %v1071 = vpop.xlane.xlu0 %1070
  %v1072 = vsel %vm628, %v998, 0.0
  %1073 = vadd.xlane.f32.xlu0 %v1072
  %v1074 = vpop.xlane.xlu0 %1073
  %v1075 = vsel %vm628, %v999, 0.0
  %1076 = vadd.xlane.f32.xlu0 %v1075
  %v1077 = vpop.xlane.xlu0 %1076
  %v1078 = vsel %vm628, %v1000, 0.0
  %1079 = vadd.xlane.f32.xlu0 %v1078
  %v1080 = vpop.xlane.xlu0 %1079
  %v1081 = vsel %vm628, %v1001, 0.0
  %1082 = vadd.xlane.f32.xlu0 %v1081
  %v1083 = vpop.xlane.xlu0 %1082
  %v1084 = vsel %vm628, %v1002, 0.0
  %1085 = vadd.xlane.f32.xlu0 %v1084
  %v1086 = vpop.xlane.xlu0 %1085
  %v1087 = vsel %vm628, %v1003, 0.0
  %1088 = vadd.xlane.f32.xlu0 %v1087
  %v1089 = vpop.xlane.xlu0 %1088
  %v1090 = vsel %vm628, %v1004, 0.0
  %1091 = vadd.xlane.f32.xlu0 %v1090
  %v1092 = vpop.xlane.xlu0 %1091
  %v1093 = vsel %vm628, %v1005, 0.0
  %1094 = vadd.xlane.f32.xlu0 %v1093
  %v1095 = vpop.xlane.xlu0 %1094
  %v1096 = vsel %vm628, %v1006, 0.0
  %1097 = vadd.xlane.f32.xlu0 %v1096
  %v1098 = vpop.xlane.xlu0 %1097
  %v1099 = vsel %vm628, %v1007, 0.0
  %1100 = vadd.xlane.f32.xlu0 %v1099
  %v1101 = vpop.xlane.xlu0 %1100
  %v1102 = vsel %vm628, %v1008, 0.0
  %1103 = vadd.xlane.f32.xlu0 %v1102
  %v1104 = vpop.xlane.xlu0 %1103
  %v1105 = vperm.slane %v533, 1
  %1106 = vrot.lane.b32.xlu0 %v600, 96
  %v1107 = vpop.permute.xlu0 %1106
  %1108 = vrot.lane.b32.xlu0 %v601, 96
  %v1109 = vpop.permute.xlu0 %1108
  %1110 = vrot.lane.b32.xlu0 %v602, 96
  %v1111 = vpop.permute.xlu0 %1110
  %1112 = vrot.lane.b32.xlu0 %v603, 96
  %v1113 = vpop.permute.xlu0 %1112
  %1114 = vrot.lane.b32.xlu0 %v604, 96
  %v1115 = vpop.permute.xlu0 %1114
  %1116 = vrot.lane.b32.xlu0 %v605, 96
  %v1117 = vpop.permute.xlu0 %1116
  %1118 = vrot.lane.b32.xlu0 %v606, 96
  %v1119 = vpop.permute.xlu0 %1118
  %1120 = vrot.lane.b32.xlu0 %v607, 96
  %v1121 = vpop.permute.xlu0 %1120
  %1122 = vrot.lane.b32.xlu0 %v608, 96
  %v1123 = vpop.permute.xlu0 %1122
  %1124 = vrot.lane.b32.xlu0 %v609, 96
  %v1125 = vpop.permute.xlu0 %1124
  %1126 = vrot.lane.b32.xlu0 %v610, 96
  %v1127 = vpop.permute.xlu0 %1126
  %1128 = vrot.lane.b32.xlu0 %v611, 96
  %v1129 = vpop.permute.xlu0 %1128
  %1130 = vrot.lane.b32.xlu0 %v612, 96
  %v1131 = vpop.permute.xlu0 %1130
  %1132 = vrot.lane.b32.xlu0 %v613, 96
  %v1133 = vpop.permute.xlu0 %1132
  %1134 = vrot.lane.b32.xlu0 %v614, 96
  %v1135 = vpop.permute.xlu0 %1134
  %1136 = vrot.lane.b32.xlu0 %v615, 96
  %v1137 = vpop.permute.xlu0 %1136
  %v1142 = vunpack.c.l.b16 %v513
  %v1143 = vunpack.c.l.b16 %v514
  %v1144 = vunpack.c.l.b16 %v515
  %v1145 = vunpack.c.l.b16 %v516
  %v1146 = vpack.c.b16 %v1143, %v1142
  %v1147 = vpack.c.b16 %v1145, %v1144
  %v1151 = vsel %vm628, %v1107, 0
  %v1154 = vsel %vm628, %v1109, 0
  %v1157 = vsel %vm628, %v1111, 0
  %v1160 = vsel %vm628, %v1113, 0
  %v1163 = vsel %vm628, %v1115, 0
  %v1166 = vsel %vm628, %v1117, 0
  %v1169 = vsel %vm628, %v1119, 0
  %v1172 = vsel %vm628, %v1121, 0
  %v1175 = vsel %vm628, %v1123, 0
  %v1178 = vsel %vm628, %v1125, 0
  %v1181 = vsel %vm628, %v1127, 0
  %v1184 = vsel %vm628, %v1129, 0
  %v1187 = vsel %vm628, %v1131, 0
  %v1190 = vsel %vm628, %v1133, 0
  %v1193 = vsel %vm628, %v1135, 0
  %v1196 = vsel %vm628, %v1137, 0
  %1198 = vmatpush.bf16.msra.mxu0 0
  %1199 = vmatpush.bf16.msra.mxu0 0
  %1200 = vmatpush.bf16.msra.mxu0 0
  %1201 = vmatpush.bf16.msra.mxu0 0
  %1202 = vmatpush.bf16.msra.mxu0 0
  %1203 = vmatpush.bf16.msra.mxu0 0
  %1204 = vmatpush.bf16.msra.mxu0 %v1147
  %1205 = vmatpush.bf16.msra.mxu0 %v1146
  %1206 = vmatmul.bf16.gmra.mxu0 %v1151
  %v1207 = vpop.f32.mrf.mxu0
  %v1208 = vadd.f32 %v1105, %v1207
  %v1209 = vpop.f32.mrf.mxu0
  %v1210 = vadd.f32 %v1105, %v1209
  %1211 = vmatmul.bf16.gmra.mxu0 %v1154
  %v1212 = vpop.f32.mrf.mxu0
  %v1213 = vadd.f32 %v1105, %v1212
  %v1214 = vpop.f32.mrf.mxu0
  %v1215 = vadd.f32 %v1105, %v1214
  %1216 = vmatmul.bf16.gmra.mxu0 %v1157
  %v1217 = vpop.f32.mrf.mxu0
  %v1218 = vadd.f32 %v1105, %v1217
  %v1219 = vpop.f32.mrf.mxu0
  %v1220 = vadd.f32 %v1105, %v1219
  %1221 = vmatmul.bf16.gmra.mxu0 %v1160
  %v1222 = vpop.f32.mrf.mxu0
  %v1223 = vadd.f32 %v1105, %v1222
  %v1224 = vpop.f32.mrf.mxu0
  %v1225 = vadd.f32 %v1105, %v1224
  %1226 = vmatmul.bf16.gmra.mxu0 %v1163
  %v1227 = vpop.f32.mrf.mxu0
  %v1228 = vadd.f32 %v1105, %v1227
  %v1229 = vpop.f32.mrf.mxu0
  %v1230 = vadd.f32 %v1105, %v1229
  %1231 = vmatmul.bf16.gmra.mxu0 %v1166
  %v1232 = vpop.f32.mrf.mxu0
  %v1233 = vadd.f32 %v1105, %v1232
  %v1234 = vpop.f32.mrf.mxu0
  %v1235 = vadd.f32 %v1105, %v1234
  %1236 = vmatmul.bf16.gmra.mxu0 %v1169
  %v1237 = vpop.f32.mrf.mxu0
  %v1238 = vadd.f32 %v1105, %v1237
  %v1239 = vpop.f32.mrf.mxu0
  %v1240 = vadd.f32 %v1105, %v1239
  %1241 = vmatmul.bf16.gmra.mxu0 %v1172
  %v1242 = vpop.f32.mrf.mxu0
  %v1243 = vadd.f32 %v1105, %v1242
  %v1244 = vpop.f32.mrf.mxu0
  %v1245 = vadd.f32 %v1105, %v1244
  %1246 = vmatmul.bf16.gmra.mxu0 %v1175
  %v1247 = vpop.f32.mrf.mxu0
  %v1248 = vadd.f32 %v1105, %v1247
  %v1249 = vpop.f32.mrf.mxu0
  %v1250 = vadd.f32 %v1105, %v1249
  %1251 = vmatmul.bf16.gmra.mxu0 %v1178
  %v1252 = vpop.f32.mrf.mxu0
  %v1253 = vadd.f32 %v1105, %v1252
  %v1254 = vpop.f32.mrf.mxu0
  %v1255 = vadd.f32 %v1105, %v1254
  %1256 = vmatmul.bf16.gmra.mxu0 %v1181
  %v1257 = vpop.f32.mrf.mxu0
  %v1258 = vadd.f32 %v1105, %v1257
  %v1259 = vpop.f32.mrf.mxu0
  %v1260 = vadd.f32 %v1105, %v1259
  %1261 = vmatmul.bf16.gmra.mxu0 %v1184
  %v1262 = vpop.f32.mrf.mxu0
  %v1263 = vadd.f32 %v1105, %v1262
  %v1264 = vpop.f32.mrf.mxu0
  %v1265 = vadd.f32 %v1105, %v1264
  %1266 = vmatmul.bf16.gmra.mxu0 %v1187
  %v1267 = vpop.f32.mrf.mxu0
  %v1268 = vadd.f32 %v1105, %v1267
  %v1269 = vpop.f32.mrf.mxu0
  %v1270 = vadd.f32 %v1105, %v1269
  %1271 = vmatmul.bf16.gmra.mxu0 %v1190
  %v1272 = vpop.f32.mrf.mxu0
  %v1273 = vadd.f32 %v1105, %v1272
  %v1274 = vpop.f32.mrf.mxu0
  %v1275 = vadd.f32 %v1105, %v1274
  %1276 = vmatmul.bf16.gmra.mxu0 %v1193
  %v1277 = vpop.f32.mrf.mxu0
  %v1278 = vadd.f32 %v1105, %v1277
  %v1279 = vpop.f32.mrf.mxu0
  %v1280 = vadd.f32 %v1105, %v1279
  %1281 = vmatmul.bf16.gmra.mxu0 %v1196
  %v1282 = vpop.f32.mrf.mxu0
  %v1283 = vadd.f32 %v1105, %v1282
  %v1284 = vpop.f32.mrf.mxu0
  %v1285 = vadd.f32 %v1105, %v1284
  %1286 = vdwg.mxu0
  %v1287 = vmax.f32 %v1208, 0.0
  %v1288 = vmax.f32 %v1210, 0.0
  %v1289 = vmax.f32 %v1213, 0.0
  %v1290 = vmax.f32 %v1215, 0.0
  %v1291 = vmax.f32 %v1218, 0.0
  %v1292 = vmax.f32 %v1220, 0.0
  %v1293 = vmax.f32 %v1223, 0.0
  %v1294 = vmax.f32 %v1225, 0.0
  %v1295 = vmax.f32 %v1228, 0.0
  %v1296 = vmax.f32 %v1230, 0.0
  %v1297 = vmax.f32 %v1233, 0.0
  %v1298 = vmax.f32 %v1235, 0.0
  %v1299 = vmax.f32 %v1238, 0.0
  %v1300 = vmax.f32 %v1240, 0.0
  %v1301 = vmax.f32 %v1243, 0.0
  %v1302 = vmax.f32 %v1245, 0.0
  %v1303 = vmax.f32 %v1248, 0.0
  %v1304 = vmax.f32 %v1250, 0.0
  %v1305 = vmax.f32 %v1253, 0.0
  %v1306 = vmax.f32 %v1255, 0.0
  %v1307 = vmax.f32 %v1258, 0.0
  %v1308 = vmax.f32 %v1260, 0.0
  %v1309 = vmax.f32 %v1263, 0.0
  %v1310 = vmax.f32 %v1265, 0.0
  %v1311 = vmax.f32 %v1268, 0.0
  %v1312 = vmax.f32 %v1270, 0.0
  %v1313 = vmax.f32 %v1273, 0.0
  %v1314 = vmax.f32 %v1275, 0.0
  %v1315 = vmax.f32 %v1278, 0.0
  %v1316 = vmax.f32 %v1280, 0.0
  %v1317 = vmax.f32 %v1283, 0.0
  %v1318 = vmax.f32 %v1285, 0.0
  %v1319 = vpack.c.bf16 %v1288, %v1287
  %v1320 = vpack.c.bf16 %v1290, %v1289
  %v1321 = vpack.c.bf16 %v1292, %v1291
  %v1322 = vpack.c.bf16 %v1294, %v1293
  %v1323 = vpack.c.bf16 %v1296, %v1295
  %v1324 = vpack.c.bf16 %v1298, %v1297
  %v1325 = vpack.c.bf16 %v1300, %v1299
  %v1326 = vpack.c.bf16 %v1302, %v1301
  %v1327 = vpack.c.bf16 %v1304, %v1303
  %v1328 = vpack.c.bf16 %v1306, %v1305
  %v1329 = vpack.c.bf16 %v1308, %v1307
  %v1330 = vpack.c.bf16 %v1310, %v1309
  %v1331 = vpack.c.bf16 %v1312, %v1311
  %v1332 = vpack.c.bf16 %v1314, %v1313
  %v1333 = vpack.c.bf16 %v1316, %v1315
  %v1334 = vpack.c.bf16 %v1318, %v1317
  %v1335 = vperm.slane %v534, 1
  %v1344 = vunpack.c.l.b16 %v525
  %v1345 = vunpack.c.l.b16 %v526
  %v1346 = vunpack.c.l.b16 %v527
  %v1347 = vunpack.c.l.b16 %v528
  %v1348 = vunpack.c.l.b16 %v529
  %v1349 = vunpack.c.l.b16 %v530
  %v1350 = vunpack.c.l.b16 %v531
  %v1351 = vunpack.c.l.b16 %v532
  %v1352 = vpack.c.b16 %v1345, %v1344
  %v1353 = vpack.c.b16 %v1347, %v1346
  %v1354 = vpack.c.b16 %v1349, %v1348
  %v1355 = vpack.c.b16 %v1351, %v1350
  %v1361 = vsel %vm839, %v1319, 0
  %v1364 = vsel %vm839, %v1320, 0
  %v1367 = vsel %vm839, %v1321, 0
  %v1370 = vsel %vm839, %v1322, 0
  %v1373 = vsel %vm839, %v1323, 0
  %v1376 = vsel %vm839, %v1324, 0
  %v1379 = vsel %vm839, %v1325, 0
  %v1382 = vsel %vm839, %v1326, 0
  %v1385 = vsel %vm839, %v1327, 0
  %v1388 = vsel %vm839, %v1328, 0
  %v1391 = vsel %vm839, %v1329, 0
  %v1394 = vsel %vm839, %v1330, 0
  %v1397 = vsel %vm839, %v1331, 0
  %v1400 = vsel %vm839, %v1332, 0
  %v1403 = vsel %vm839, %v1333, 0
  %v1406 = vsel %vm839, %v1334, 0
  %1408 = vmatpush.bf16.msra.mxu0 0
  %1409 = vmatpush.bf16.msra.mxu0 0
  %1410 = vmatpush.bf16.msra.mxu0 0
  %1411 = vmatpush.bf16.msra.mxu0 0
  %1412 = vmatpush.bf16.msra.mxu0 %v1355
  %1413 = vmatpush.bf16.msra.mxu0 %v1354
  %1414 = vmatpush.bf16.msra.mxu0 %v1353
  %1415 = vmatpush.bf16.msra.mxu0 %v1352
  %1416 = vmatmul.bf16.gmra.mxu0 %v1361
  %v1417 = vpop.f32.mrf.mxu0
  %v1418 = vadd.f32 %v1335, %v1417
  %v1419 = vpop.f32.mrf.mxu0
  %v1420 = vadd.f32 %v1335, %v1419
  %1421 = vmatmul.bf16.gmra.mxu0 %v1364
  %v1422 = vpop.f32.mrf.mxu0
  %v1423 = vadd.f32 %v1335, %v1422
  %v1424 = vpop.f32.mrf.mxu0
  %v1425 = vadd.f32 %v1335, %v1424
  %1426 = vmatmul.bf16.gmra.mxu0 %v1367
  %v1427 = vpop.f32.mrf.mxu0
  %v1428 = vadd.f32 %v1335, %v1427
  %v1429 = vpop.f32.mrf.mxu0
  %v1430 = vadd.f32 %v1335, %v1429
  %1431 = vmatmul.bf16.gmra.mxu0 %v1370
  %v1432 = vpop.f32.mrf.mxu0
  %v1433 = vadd.f32 %v1335, %v1432
  %v1434 = vpop.f32.mrf.mxu0
  %v1435 = vadd.f32 %v1335, %v1434
  %1436 = vmatmul.bf16.gmra.mxu0 %v1373
  %v1437 = vpop.f32.mrf.mxu0
  %v1438 = vadd.f32 %v1335, %v1437
  %v1439 = vpop.f32.mrf.mxu0
  %v1440 = vadd.f32 %v1335, %v1439
  %1441 = vmatmul.bf16.gmra.mxu0 %v1376
  %v1442 = vpop.f32.mrf.mxu0
  %v1443 = vadd.f32 %v1335, %v1442
  %v1444 = vpop.f32.mrf.mxu0
  %v1445 = vadd.f32 %v1335, %v1444
  %1446 = vmatmul.bf16.gmra.mxu0 %v1379
  %v1447 = vpop.f32.mrf.mxu0
  %v1448 = vadd.f32 %v1335, %v1447
  %v1449 = vpop.f32.mrf.mxu0
  %v1450 = vadd.f32 %v1335, %v1449
  %1451 = vmatmul.bf16.gmra.mxu0 %v1382
  %v1452 = vpop.f32.mrf.mxu0
  %v1453 = vadd.f32 %v1335, %v1452
  %v1454 = vpop.f32.mrf.mxu0
  %v1455 = vadd.f32 %v1335, %v1454
  %1456 = vmatmul.bf16.gmra.mxu0 %v1385
  %v1457 = vpop.f32.mrf.mxu0
  %v1458 = vadd.f32 %v1335, %v1457
  %v1459 = vpop.f32.mrf.mxu0
  %v1460 = vadd.f32 %v1335, %v1459
  %1461 = vmatmul.bf16.gmra.mxu0 %v1388
  %v1462 = vpop.f32.mrf.mxu0
  %v1463 = vadd.f32 %v1335, %v1462
  %v1464 = vpop.f32.mrf.mxu0
  %v1465 = vadd.f32 %v1335, %v1464
  %1466 = vmatmul.bf16.gmra.mxu0 %v1391
  %v1467 = vpop.f32.mrf.mxu0
  %v1468 = vadd.f32 %v1335, %v1467
  %v1469 = vpop.f32.mrf.mxu0
  %v1470 = vadd.f32 %v1335, %v1469
  %1471 = vmatmul.bf16.gmra.mxu0 %v1394
  %v1472 = vpop.f32.mrf.mxu0
  %v1473 = vadd.f32 %v1335, %v1472
  %v1474 = vpop.f32.mrf.mxu0
  %v1475 = vadd.f32 %v1335, %v1474
  %1476 = vmatmul.bf16.gmra.mxu0 %v1397
  %v1477 = vpop.f32.mrf.mxu0
  %v1478 = vadd.f32 %v1335, %v1477
  %v1479 = vpop.f32.mrf.mxu0
  %v1480 = vadd.f32 %v1335, %v1479
  %1481 = vmatmul.bf16.gmra.mxu0 %v1400
  %v1482 = vpop.f32.mrf.mxu0
  %v1483 = vadd.f32 %v1335, %v1482
  %v1484 = vpop.f32.mrf.mxu0
  %v1485 = vadd.f32 %v1335, %v1484
  %1486 = vmatmul.bf16.gmra.mxu0 %v1403
  %v1487 = vpop.f32.mrf.mxu0
  %v1488 = vadd.f32 %v1335, %v1487
  %v1489 = vpop.f32.mrf.mxu0
  %v1490 = vadd.f32 %v1335, %v1489
  %1491 = vmatmul.bf16.gmra.mxu0 %v1406
  %v1492 = vpop.f32.mrf.mxu0
  %v1493 = vadd.f32 %v1335, %v1492
  %v1494 = vpop.f32.mrf.mxu0
  %v1495 = vadd.f32 %v1335, %v1494
  %1496 = vdwg.mxu0
  %v1497 = vmul.f32 %v1418, %v430
  %v1498 = vmul.f32 %v1420, %v432
  %v1499 = vmul.f32 %v1423, %v435
  %v1500 = vmul.f32 %v1425, %v437
  %v1501 = vmul.f32 %v1428, %v440
  %v1502 = vmul.f32 %v1430, %v442
  %v1503 = vmul.f32 %v1433, %v445
  %v1504 = vmul.f32 %v1435, %v447
  %v1505 = vmul.f32 %v1438, %v450
  %v1506 = vmul.f32 %v1440, %v452
  %v1507 = vmul.f32 %v1443, %v455
  %v1508 = vmul.f32 %v1445, %v457
  %v1509 = vmul.f32 %v1448, %v460
  %v1510 = vmul.f32 %v1450, %v462
  %v1511 = vmul.f32 %v1453, %v465
  %v1512 = vmul.f32 %v1455, %v467
  %v1513 = vmul.f32 %v1458, %v470
  %v1514 = vmul.f32 %v1460, %v472
  %v1515 = vmul.f32 %v1463, %v475
  %v1516 = vmul.f32 %v1465, %v477
  %v1517 = vmul.f32 %v1468, %v480
  %v1518 = vmul.f32 %v1470, %v482
  %v1519 = vmul.f32 %v1473, %v485
  %v1520 = vmul.f32 %v1475, %v487
  %v1521 = vmul.f32 %v1478, %v490
  %v1522 = vmul.f32 %v1480, %v492
  %v1523 = vmul.f32 %v1483, %v495
  %v1524 = vmul.f32 %v1485, %v497
  %v1525 = vmul.f32 %v1488, %v500
  %v1526 = vmul.f32 %v1490, %v502
  %v1527 = vmul.f32 %v1493, %v505
  %v1528 = vmul.f32 %v1495, %v507
  %v1529 = vsel %vm628, %v1497, 0.0
  %1530 = vadd.xlane.f32.xlu0 %v1529
  %v1531 = vpop.xlane.xlu0 %1530
  %v1532 = vsel %vm628, %v1498, 0.0
  %1533 = vadd.xlane.f32.xlu0 %v1532
  %v1534 = vpop.xlane.xlu0 %1533
  %v1535 = vsel %vm628, %v1499, 0.0
  %1536 = vadd.xlane.f32.xlu0 %v1535
  %v1537 = vpop.xlane.xlu0 %1536
  %v1538 = vsel %vm628, %v1500, 0.0
  %1539 = vadd.xlane.f32.xlu0 %v1538
  %v1540 = vpop.xlane.xlu0 %1539
  %v1541 = vsel %vm628, %v1501, 0.0
  %1542 = vadd.xlane.f32.xlu0 %v1541
  %v1543 = vpop.xlane.xlu0 %1542
  %v1544 = vsel %vm628, %v1502, 0.0
  %1545 = vadd.xlane.f32.xlu0 %v1544
  %v1546 = vpop.xlane.xlu0 %1545
  %v1547 = vsel %vm628, %v1503, 0.0
  %1548 = vadd.xlane.f32.xlu0 %v1547
  %v1549 = vpop.xlane.xlu0 %1548
  %v1550 = vsel %vm628, %v1504, 0.0
  %1551 = vadd.xlane.f32.xlu0 %v1550
  %v1552 = vpop.xlane.xlu0 %1551
  %v1553 = vsel %vm628, %v1505, 0.0
  %1554 = vadd.xlane.f32.xlu0 %v1553
  %v1555 = vpop.xlane.xlu0 %1554
  %v1556 = vsel %vm628, %v1506, 0.0
  %1557 = vadd.xlane.f32.xlu0 %v1556
  %v1558 = vpop.xlane.xlu0 %1557
  %v1559 = vsel %vm628, %v1507, 0.0
  %1560 = vadd.xlane.f32.xlu0 %v1559
  %v1561 = vpop.xlane.xlu0 %1560
  %v1562 = vsel %vm628, %v1508, 0.0
  %1563 = vadd.xlane.f32.xlu0 %v1562
  %v1564 = vpop.xlane.xlu0 %1563
  %v1565 = vsel %vm628, %v1509, 0.0
  %1566 = vadd.xlane.f32.xlu0 %v1565
  %v1567 = vpop.xlane.xlu0 %1566
  %v1568 = vsel %vm628, %v1510, 0.0
  %1569 = vadd.xlane.f32.xlu0 %v1568
  %v1570 = vpop.xlane.xlu0 %1569
  %v1571 = vsel %vm628, %v1511, 0.0
  %1572 = vadd.xlane.f32.xlu0 %v1571
  %v1573 = vpop.xlane.xlu0 %1572
  %v1574 = vsel %vm628, %v1512, 0.0
  %1575 = vadd.xlane.f32.xlu0 %v1574
  %v1576 = vpop.xlane.xlu0 %1575
  %v1577 = vsel %vm628, %v1513, 0.0
  %1578 = vadd.xlane.f32.xlu0 %v1577
  %v1579 = vpop.xlane.xlu0 %1578
  %v1580 = vsel %vm628, %v1514, 0.0
  %1581 = vadd.xlane.f32.xlu0 %v1580
  %v1582 = vpop.xlane.xlu0 %1581
  %v1583 = vsel %vm628, %v1515, 0.0
  %1584 = vadd.xlane.f32.xlu0 %v1583
  %v1585 = vpop.xlane.xlu0 %1584
  %v1586 = vsel %vm628, %v1516, 0.0
  %1587 = vadd.xlane.f32.xlu0 %v1586
  %v1588 = vpop.xlane.xlu0 %1587
  %v1589 = vsel %vm628, %v1517, 0.0
  %1590 = vadd.xlane.f32.xlu0 %v1589
  %v1591 = vpop.xlane.xlu0 %1590
  %v1592 = vsel %vm628, %v1518, 0.0
  %1593 = vadd.xlane.f32.xlu0 %v1592
  %v1594 = vpop.xlane.xlu0 %1593
  %v1595 = vsel %vm628, %v1519, 0.0
  %1596 = vadd.xlane.f32.xlu0 %v1595
  %v1597 = vpop.xlane.xlu0 %1596
  %v1598 = vsel %vm628, %v1520, 0.0
  %1599 = vadd.xlane.f32.xlu0 %v1598
  %v1600 = vpop.xlane.xlu0 %1599
  %v1601 = vsel %vm628, %v1521, 0.0
  %1602 = vadd.xlane.f32.xlu0 %v1601
  %v1603 = vpop.xlane.xlu0 %1602
  %v1604 = vsel %vm628, %v1522, 0.0
  %1605 = vadd.xlane.f32.xlu0 %v1604
  %v1606 = vpop.xlane.xlu0 %1605
  %v1607 = vsel %vm628, %v1523, 0.0
  %1608 = vadd.xlane.f32.xlu0 %v1607
  %v1609 = vpop.xlane.xlu0 %1608
  %v1610 = vsel %vm628, %v1524, 0.0
  %1611 = vadd.xlane.f32.xlu0 %v1610
  %v1612 = vpop.xlane.xlu0 %1611
  %v1613 = vsel %vm628, %v1525, 0.0
  %1614 = vadd.xlane.f32.xlu0 %v1613
  %v1615 = vpop.xlane.xlu0 %1614
  %v1616 = vsel %vm628, %v1526, 0.0
  %1617 = vadd.xlane.f32.xlu0 %v1616
  %v1618 = vpop.xlane.xlu0 %1617
  %v1619 = vsel %vm628, %v1527, 0.0
  %1620 = vadd.xlane.f32.xlu0 %v1619
  %v1621 = vpop.xlane.xlu0 %1620
  %v1622 = vsel %vm628, %v1528, 0.0
  %1623 = vadd.xlane.f32.xlu0 %v1622
  %v1624 = vpop.xlane.xlu0 %1623
  %vm1625 = vcmask 7168
  %v1626 = vsel %vm1625, %v1011, %v1531
  %v1627 = vsel %vm1625, %v1014, %v1534
  %v1628 = vsel %vm1625, %v1017, %v1537
  %v1629 = vsel %vm1625, %v1020, %v1540
  %v1630 = vsel %vm1625, %v1023, %v1543
  %v1631 = vsel %vm1625, %v1026, %v1546
  %v1632 = vsel %vm1625, %v1029, %v1549
  %v1633 = vsel %vm1625, %v1032, %v1552
  %v1634 = vsel %vm1625, %v1035, %v1555
  %v1635 = vsel %vm1625, %v1038, %v1558
  %v1636 = vsel %vm1625, %v1041, %v1561
  %v1637 = vsel %vm1625, %v1044, %v1564
  %v1638 = vsel %vm1625, %v1047, %v1567
  %v1639 = vsel %vm1625, %v1050, %v1570
  %v1640 = vsel %vm1625, %v1053, %v1573
  %v1641 = vsel %vm1625, %v1056, %v1576
  %v1642 = vsel %vm1625, %v1059, %v1579
  %v1643 = vsel %vm1625, %v1062, %v1582
  %v1644 = vsel %vm1625, %v1065, %v1585
  %v1645 = vsel %vm1625, %v1068, %v1588
  %v1646 = vsel %vm1625, %v1071, %v1591
  %v1647 = vsel %vm1625, %v1074, %v1594
  %v1648 = vsel %vm1625, %v1077, %v1597
  %v1649 = vsel %vm1625, %v1080, %v1600
  %v1650 = vsel %vm1625, %v1083, %v1603
  %v1651 = vsel %vm1625, %v1086, %v1606
  %v1652 = vsel %vm1625, %v1089, %v1609
  %v1653 = vsel %vm1625, %v1092, %v1612
  %v1654 = vsel %vm1625, %v1095, %v1615
  %v1655 = vsel %vm1625, %v1098, %v1618
  %v1656 = vsel %vm1625, %v1101, %v1621
  %v1657 = vsel %vm1625, %v1104, %v1624
  %vm1658 = vcmask 15360
  %v1659 = vsel %vm1658, %v1626, -inf
  %1660 = vmax.xlane.f32.xlu0 %v1659
  %v1661 = vpop.xlane.xlu0 %1660
  %v1662 = vsel %vm1658, %v1627, -inf
  %1663 = vmax.xlane.f32.xlu0 %v1662
  %v1664 = vpop.xlane.xlu0 %1663
  %v1665 = vsel %vm1658, %v1628, -inf
  %1666 = vmax.xlane.f32.xlu0 %v1665
  %v1667 = vpop.xlane.xlu0 %1666
  %v1668 = vsel %vm1658, %v1629, -inf
  %1669 = vmax.xlane.f32.xlu0 %v1668
  %v1670 = vpop.xlane.xlu0 %1669
  %v1671 = vsel %vm1658, %v1630, -inf
  %1672 = vmax.xlane.f32.xlu0 %v1671
  %v1673 = vpop.xlane.xlu0 %1672
  %v1674 = vsel %vm1658, %v1631, -inf
  %1675 = vmax.xlane.f32.xlu0 %v1674
  %v1676 = vpop.xlane.xlu0 %1675
  %v1677 = vsel %vm1658, %v1632, -inf
  %1678 = vmax.xlane.f32.xlu0 %v1677
  %v1679 = vpop.xlane.xlu0 %1678
  %v1680 = vsel %vm1658, %v1633, -inf
  %1681 = vmax.xlane.f32.xlu0 %v1680
  %v1682 = vpop.xlane.xlu0 %1681
  %v1683 = vsel %vm1658, %v1634, -inf
  %1684 = vmax.xlane.f32.xlu0 %v1683
  %v1685 = vpop.xlane.xlu0 %1684
  %v1686 = vsel %vm1658, %v1635, -inf
  %1687 = vmax.xlane.f32.xlu0 %v1686
  %v1688 = vpop.xlane.xlu0 %1687
  %v1689 = vsel %vm1658, %v1636, -inf
  %1690 = vmax.xlane.f32.xlu0 %v1689
  %v1691 = vpop.xlane.xlu0 %1690
  %v1692 = vsel %vm1658, %v1637, -inf
  %1693 = vmax.xlane.f32.xlu0 %v1692
  %v1694 = vpop.xlane.xlu0 %1693
  %v1695 = vsel %vm1658, %v1638, -inf
  %1696 = vmax.xlane.f32.xlu0 %v1695
  %v1697 = vpop.xlane.xlu0 %1696
  %v1698 = vsel %vm1658, %v1639, -inf
  %1699 = vmax.xlane.f32.xlu0 %v1698
  %v1700 = vpop.xlane.xlu0 %1699
  %v1701 = vsel %vm1658, %v1640, -inf
  %1702 = vmax.xlane.f32.xlu0 %v1701
  %v1703 = vpop.xlane.xlu0 %1702
  %v1704 = vsel %vm1658, %v1641, -inf
  %1705 = vmax.xlane.f32.xlu0 %v1704
  %v1706 = vpop.xlane.xlu0 %1705
  %v1707 = vsel %vm1658, %v1642, -inf
  %1708 = vmax.xlane.f32.xlu0 %v1707
  %v1709 = vpop.xlane.xlu0 %1708
  %v1710 = vsel %vm1658, %v1643, -inf
  %1711 = vmax.xlane.f32.xlu0 %v1710
  %v1712 = vpop.xlane.xlu0 %1711
  %v1713 = vsel %vm1658, %v1644, -inf
  %1714 = vmax.xlane.f32.xlu0 %v1713
  %v1715 = vpop.xlane.xlu0 %1714
  %v1716 = vsel %vm1658, %v1645, -inf
  %1717 = vmax.xlane.f32.xlu0 %v1716
  %v1718 = vpop.xlane.xlu0 %1717
  %v1719 = vsel %vm1658, %v1646, -inf
  %1720 = vmax.xlane.f32.xlu0 %v1719
  %v1721 = vpop.xlane.xlu0 %1720
  %v1722 = vsel %vm1658, %v1647, -inf
  %1723 = vmax.xlane.f32.xlu0 %v1722
  %v1724 = vpop.xlane.xlu0 %1723
  %v1725 = vsel %vm1658, %v1648, -inf
  %1726 = vmax.xlane.f32.xlu0 %v1725
  %v1727 = vpop.xlane.xlu0 %1726
  %v1728 = vsel %vm1658, %v1649, -inf
  %1729 = vmax.xlane.f32.xlu0 %v1728
  %v1730 = vpop.xlane.xlu0 %1729
  %v1731 = vsel %vm1658, %v1650, -inf
  %1732 = vmax.xlane.f32.xlu0 %v1731
  %v1733 = vpop.xlane.xlu0 %1732
  %v1734 = vsel %vm1658, %v1651, -inf
  %1735 = vmax.xlane.f32.xlu0 %v1734
  %v1736 = vpop.xlane.xlu0 %1735
  %v1737 = vsel %vm1658, %v1652, -inf
  %1738 = vmax.xlane.f32.xlu0 %v1737
  %v1739 = vpop.xlane.xlu0 %1738
  %v1740 = vsel %vm1658, %v1653, -inf
  %1741 = vmax.xlane.f32.xlu0 %v1740
  %v1742 = vpop.xlane.xlu0 %1741
  %v1743 = vsel %vm1658, %v1654, -inf
  %1744 = vmax.xlane.f32.xlu0 %v1743
  %v1745 = vpop.xlane.xlu0 %1744
  %v1746 = vsel %vm1658, %v1655, -inf
  %1747 = vmax.xlane.f32.xlu0 %v1746
  %v1748 = vpop.xlane.xlu0 %1747
  %v1749 = vsel %vm1658, %v1656, -inf
  %1750 = vmax.xlane.f32.xlu0 %v1749
  %v1751 = vpop.xlane.xlu0 %1750
  %v1752 = vsel %vm1658, %v1657, -inf
  %1753 = vmax.xlane.f32.xlu0 %v1752
  %v1754 = vpop.xlane.xlu0 %1753
  %v1755 = vsub.f32 %v1626, %v1661
  %v1756 = vsub.f32 %v1627, %v1664
  %v1757 = vsub.f32 %v1628, %v1667
  %v1758 = vsub.f32 %v1629, %v1670
  %v1759 = vsub.f32 %v1630, %v1673
  %v1760 = vsub.f32 %v1631, %v1676
  %v1761 = vsub.f32 %v1632, %v1679
  %v1762 = vsub.f32 %v1633, %v1682
  %v1763 = vsub.f32 %v1634, %v1685
  %v1764 = vsub.f32 %v1635, %v1688
  %v1765 = vsub.f32 %v1636, %v1691
  %v1766 = vsub.f32 %v1637, %v1694
  %v1767 = vsub.f32 %v1638, %v1697
  %v1768 = vsub.f32 %v1639, %v1700
  %v1769 = vsub.f32 %v1640, %v1703
  %v1770 = vsub.f32 %v1641, %v1706
  %v1771 = vsub.f32 %v1642, %v1709
  %v1772 = vsub.f32 %v1643, %v1712
  %v1773 = vsub.f32 %v1644, %v1715
  %v1774 = vsub.f32 %v1645, %v1718
  %v1775 = vsub.f32 %v1646, %v1721
  %v1776 = vsub.f32 %v1647, %v1724
  %v1777 = vsub.f32 %v1648, %v1727
  %v1778 = vsub.f32 %v1649, %v1730
  %v1779 = vsub.f32 %v1650, %v1733
  %v1780 = vsub.f32 %v1651, %v1736
  %v1781 = vsub.f32 %v1652, %v1739
  %v1782 = vsub.f32 %v1653, %v1742
  %v1783 = vsub.f32 %v1654, %v1745
  %v1784 = vsub.f32 %v1655, %v1748
  %v1785 = vsub.f32 %v1656, %v1751
  %v1786 = vsub.f32 %v1657, %v1754
  %v1787 = vmul.f32 %v1755, 1.442695
  %v1788 = vpow.pop %v1787
  %v1789 = vmul.f32 %v1756, 1.442695
  %v1790 = vpow.pop %v1789
  %v1791 = vmul.f32 %v1757, 1.442695
  %v1792 = vpow.pop %v1791
  %v1793 = vmul.f32 %v1758, 1.442695
  %v1794 = vpow.pop %v1793
  %v1795 = vmul.f32 %v1759, 1.442695
  %v1796 = vpow.pop %v1795
  %v1797 = vmul.f32 %v1760, 1.442695
  %v1798 = vpow.pop %v1797
  %v1799 = vmul.f32 %v1761, 1.442695
  %v1800 = vpow.pop %v1799
  %v1801 = vmul.f32 %v1762, 1.442695
  %v1802 = vpow.pop %v1801
  %v1803 = vmul.f32 %v1763, 1.442695
  %v1804 = vpow.pop %v1803
  %v1805 = vmul.f32 %v1764, 1.442695
  %v1806 = vpow.pop %v1805
  %v1807 = vmul.f32 %v1765, 1.442695
  %v1808 = vpow.pop %v1807
  %v1809 = vmul.f32 %v1766, 1.442695
  %v1810 = vpow.pop %v1809
  %v1811 = vmul.f32 %v1767, 1.442695
  %v1812 = vpow.pop %v1811
  %v1813 = vmul.f32 %v1768, 1.442695
  %v1814 = vpow.pop %v1813
  %v1815 = vmul.f32 %v1769, 1.442695
  %v1816 = vpow.pop %v1815
  %v1817 = vmul.f32 %v1770, 1.442695
  %v1818 = vpow.pop %v1817
  %v1819 = vmul.f32 %v1771, 1.442695
  %v1820 = vpow.pop %v1819
  %v1821 = vmul.f32 %v1772, 1.442695
  %v1822 = vpow.pop %v1821
  %v1823 = vmul.f32 %v1773, 1.442695
  %v1824 = vpow.pop %v1823
  %v1825 = vmul.f32 %v1774, 1.442695
  %v1826 = vpow.pop %v1825
  %v1827 = vmul.f32 %v1775, 1.442695
  %v1828 = vpow.pop %v1827
  %v1829 = vmul.f32 %v1776, 1.442695
  %v1830 = vpow.pop %v1829
  %v1831 = vmul.f32 %v1777, 1.442695
  %v1832 = vpow.pop %v1831
  %v1833 = vmul.f32 %v1778, 1.442695
  %v1834 = vpow.pop %v1833
  %v1835 = vmul.f32 %v1779, 1.442695
  %v1836 = vpow.pop %v1835
  %v1837 = vmul.f32 %v1780, 1.442695
  %v1838 = vpow.pop %v1837
  %v1839 = vmul.f32 %v1781, 1.442695
  %v1840 = vpow.pop %v1839
  %v1841 = vmul.f32 %v1782, 1.442695
  %v1842 = vpow.pop %v1841
  %v1843 = vmul.f32 %v1783, 1.442695
  %v1844 = vpow.pop %v1843
  %v1845 = vmul.f32 %v1784, 1.442695
  %v1846 = vpow.pop %v1845
  %v1847 = vmul.f32 %v1785, 1.442695
  %v1848 = vpow.pop %v1847
  %v1849 = vmul.f32 %v1786, 1.442695
  %v1850 = vpow.pop %v1849
  %v1851 = vsel %vm1658, %v1788, 0.0
  %1852 = vadd.xlane.f32.xlu0 %v1851
  %v1853 = vpop.xlane.xlu0 %1852
  %v1854 = vsel %vm1658, %v1790, 0.0
  %1855 = vadd.xlane.f32.xlu0 %v1854
  %v1856 = vpop.xlane.xlu0 %1855
  %v1857 = vsel %vm1658, %v1792, 0.0
  %1858 = vadd.xlane.f32.xlu0 %v1857
  %v1859 = vpop.xlane.xlu0 %1858
  %v1860 = vsel %vm1658, %v1794, 0.0
  %1861 = vadd.xlane.f32.xlu0 %v1860
  %v1862 = vpop.xlane.xlu0 %1861
  %v1863 = vsel %vm1658, %v1796, 0.0
  %1864 = vadd.xlane.f32.xlu0 %v1863
  %v1865 = vpop.xlane.xlu0 %1864
  %v1866 = vsel %vm1658, %v1798, 0.0
  %1867 = vadd.xlane.f32.xlu0 %v1866
  %v1868 = vpop.xlane.xlu0 %1867
  %v1869 = vsel %vm1658, %v1800, 0.0
  %1870 = vadd.xlane.f32.xlu0 %v1869
  %v1871 = vpop.xlane.xlu0 %1870
  %v1872 = vsel %vm1658, %v1802, 0.0
  %1873 = vadd.xlane.f32.xlu0 %v1872
  %v1874 = vpop.xlane.xlu0 %1873
  %v1875 = vsel %vm1658, %v1804, 0.0
  %1876 = vadd.xlane.f32.xlu0 %v1875
  %v1877 = vpop.xlane.xlu0 %1876
  %v1878 = vsel %vm1658, %v1806, 0.0
  %1879 = vadd.xlane.f32.xlu0 %v1878
  %v1880 = vpop.xlane.xlu0 %1879
  %v1881 = vsel %vm1658, %v1808, 0.0
  %1882 = vadd.xlane.f32.xlu0 %v1881
  %v1883 = vpop.xlane.xlu0 %1882
  %v1884 = vsel %vm1658, %v1810, 0.0
  %1885 = vadd.xlane.f32.xlu0 %v1884
  %v1886 = vpop.xlane.xlu0 %1885
  %v1887 = vsel %vm1658, %v1812, 0.0
  %1888 = vadd.xlane.f32.xlu0 %v1887
  %v1889 = vpop.xlane.xlu0 %1888
  %v1890 = vsel %vm1658, %v1814, 0.0
  %1891 = vadd.xlane.f32.xlu0 %v1890
  %v1892 = vpop.xlane.xlu0 %1891
  %v1893 = vsel %vm1658, %v1816, 0.0
  %1894 = vadd.xlane.f32.xlu0 %v1893
  %v1895 = vpop.xlane.xlu0 %1894
  %v1896 = vsel %vm1658, %v1818, 0.0
  %1897 = vadd.xlane.f32.xlu0 %v1896
  %v1898 = vpop.xlane.xlu0 %1897
  %v1899 = vsel %vm1658, %v1820, 0.0
  %1900 = vadd.xlane.f32.xlu0 %v1899
  %v1901 = vpop.xlane.xlu0 %1900
  %v1902 = vsel %vm1658, %v1822, 0.0
  %1903 = vadd.xlane.f32.xlu0 %v1902
  %v1904 = vpop.xlane.xlu0 %1903
  %v1905 = vsel %vm1658, %v1824, 0.0
  %1906 = vadd.xlane.f32.xlu0 %v1905
  %v1907 = vpop.xlane.xlu0 %1906
  %v1908 = vsel %vm1658, %v1826, 0.0
  %1909 = vadd.xlane.f32.xlu0 %v1908
  %v1910 = vpop.xlane.xlu0 %1909
  %v1911 = vsel %vm1658, %v1828, 0.0
  %1912 = vadd.xlane.f32.xlu0 %v1911
  %v1913 = vpop.xlane.xlu0 %1912
  %v1914 = vsel %vm1658, %v1830, 0.0
  %1915 = vadd.xlane.f32.xlu0 %v1914
  %v1916 = vpop.xlane.xlu0 %1915
  %v1917 = vsel %vm1658, %v1832, 0.0
  %1918 = vadd.xlane.f32.xlu0 %v1917
  %v1919 = vpop.xlane.xlu0 %1918
  %v1920 = vsel %vm1658, %v1834, 0.0
  %1921 = vadd.xlane.f32.xlu0 %v1920
  %v1922 = vpop.xlane.xlu0 %1921
  %v1923 = vsel %vm1658, %v1836, 0.0
  %1924 = vadd.xlane.f32.xlu0 %v1923
  %v1925 = vpop.xlane.xlu0 %1924
  %v1926 = vsel %vm1658, %v1838, 0.0
  %1927 = vadd.xlane.f32.xlu0 %v1926
  %v1928 = vpop.xlane.xlu0 %1927
  %v1929 = vsel %vm1658, %v1840, 0.0
  %1930 = vadd.xlane.f32.xlu0 %v1929
  %v1931 = vpop.xlane.xlu0 %1930
  %v1932 = vsel %vm1658, %v1842, 0.0
  %1933 = vadd.xlane.f32.xlu0 %v1932
  %v1934 = vpop.xlane.xlu0 %1933
  %v1935 = vsel %vm1658, %v1844, 0.0
  %1936 = vadd.xlane.f32.xlu0 %v1935
  %v1937 = vpop.xlane.xlu0 %1936
  %v1938 = vsel %vm1658, %v1846, 0.0
  %1939 = vadd.xlane.f32.xlu0 %v1938
  %v1940 = vpop.xlane.xlu0 %1939
  %v1941 = vsel %vm1658, %v1848, 0.0
  %1942 = vadd.xlane.f32.xlu0 %v1941
  %v1943 = vpop.xlane.xlu0 %1942
  %v1944 = vsel %vm1658, %v1850, 0.0
  %1945 = vadd.xlane.f32.xlu0 %v1944
  %v1946 = vpop.xlane.xlu0 %1945
  %v1947 = vrcp.pop %v1853
  %v1948 = vmul.f32 %v1853, %v1947
  %v1949 = vsub.f32 1.0, %v1948
  %v1950 = vmul.f32 %v1947, %v1949
  %v1951 = vadd.f32 %v1947, %v1950
  %vm1952 = vweird.f32 %v1853
  %vm1953 = vweird.f32 %v1947
  %vm1954 = vmor %vm1952, %vm1953
  %v1955 = vsel %vm1954, %v1947, %v1951
  %v1956 = vand.u32 2147483647, %v1853
  %vm1957 = vcmp.eq.f32.partialorder %v1956, 8.507059e+37
  %v1958 = vand.u32 %v1853, 2147483648
  %v1959 = vor.u32 1.1754944e-38, %v1958
  %v1960 = vsel %vm1957, %v1959, %v1955
  %v1961 = vmul.f32 %v1788, %v1960
  %v1962 = vrcp.pop %v1856
  %v1963 = vmul.f32 %v1856, %v1962
  %v1964 = vsub.f32 1.0, %v1963
  %v1965 = vmul.f32 %v1962, %v1964
  %v1966 = vadd.f32 %v1962, %v1965
  %vm1967 = vweird.f32 %v1856
  %vm1968 = vweird.f32 %v1962
  %vm1969 = vmor %vm1967, %vm1968
  %v1970 = vsel %vm1969, %v1962, %v1966
  %v1971 = vand.u32 2147483647, %v1856
  %vm1972 = vcmp.eq.f32.partialorder %v1971, 8.507059e+37
  %v1973 = vand.u32 %v1856, 2147483648
  %v1974 = vor.u32 1.1754944e-38, %v1973
  %v1975 = vsel %vm1972, %v1974, %v1970
  %v1976 = vmul.f32 %v1790, %v1975
  %v1977 = vrcp.pop %v1859
  %v1978 = vmul.f32 %v1859, %v1977
  %v1979 = vsub.f32 1.0, %v1978
  %v1980 = vmul.f32 %v1977, %v1979
  %v1981 = vadd.f32 %v1977, %v1980
  %vm1982 = vweird.f32 %v1859
  %vm1983 = vweird.f32 %v1977
  %vm1984 = vmor %vm1982, %vm1983
  %v1985 = vsel %vm1984, %v1977, %v1981
  %v1986 = vand.u32 2147483647, %v1859
  %vm1987 = vcmp.eq.f32.partialorder %v1986, 8.507059e+37
  %v1988 = vand.u32 %v1859, 2147483648
  %v1989 = vor.u32 1.1754944e-38, %v1988
  %v1990 = vsel %vm1987, %v1989, %v1985
  %v1991 = vmul.f32 %v1792, %v1990
  %v1992 = vrcp.pop %v1862
  %v1993 = vmul.f32 %v1862, %v1992
  %v1994 = vsub.f32 1.0, %v1993
  %v1995 = vmul.f32 %v1992, %v1994
  %v1996 = vadd.f32 %v1992, %v1995
  %vm1997 = vweird.f32 %v1862
  %vm1998 = vweird.f32 %v1992
  %vm1999 = vmor %vm1997, %vm1998
  %v2000 = vsel %vm1999, %v1992, %v1996
  %v2001 = vand.u32 2147483647, %v1862
  %vm2002 = vcmp.eq.f32.partialorder %v2001, 8.507059e+37
  %v2003 = vand.u32 %v1862, 2147483648
  %v2004 = vor.u32 1.1754944e-38, %v2003
  %v2005 = vsel %vm2002, %v2004, %v2000
  %v2006 = vmul.f32 %v1794, %v2005
  %v2007 = vrcp.pop %v1865
  %v2008 = vmul.f32 %v1865, %v2007
  %v2009 = vsub.f32 1.0, %v2008
  %v2010 = vmul.f32 %v2007, %v2009
  %v2011 = vadd.f32 %v2007, %v2010
  %vm2012 = vweird.f32 %v1865
  %vm2013 = vweird.f32 %v2007
  %vm2014 = vmor %vm2012, %vm2013
  %v2015 = vsel %vm2014, %v2007, %v2011
  %v2016 = vand.u32 2147483647, %v1865
  %vm2017 = vcmp.eq.f32.partialorder %v2016, 8.507059e+37
  %v2018 = vand.u32 %v1865, 2147483648
  %v2019 = vor.u32 1.1754944e-38, %v2018
  %v2020 = vsel %vm2017, %v2019, %v2015
  %v2021 = vmul.f32 %v1796, %v2020
  %v2022 = vrcp.pop %v1868
  %v2023 = vmul.f32 %v1868, %v2022
  %v2024 = vsub.f32 1.0, %v2023
  %v2025 = vmul.f32 %v2022, %v2024
  %v2026 = vadd.f32 %v2022, %v2025
  %vm2027 = vweird.f32 %v1868
  %vm2028 = vweird.f32 %v2022
  %vm2029 = vmor %vm2027, %vm2028
  %v2030 = vsel %vm2029, %v2022, %v2026
  %v2031 = vand.u32 2147483647, %v1868
  %vm2032 = vcmp.eq.f32.partialorder %v2031, 8.507059e+37
  %v2033 = vand.u32 %v1868, 2147483648
  %v2034 = vor.u32 1.1754944e-38, %v2033
  %v2035 = vsel %vm2032, %v2034, %v2030
  %v2036 = vmul.f32 %v1798, %v2035
  %v2037 = vrcp.pop %v1871
  %v2038 = vmul.f32 %v1871, %v2037
  %v2039 = vsub.f32 1.0, %v2038
  %v2040 = vmul.f32 %v2037, %v2039
  %v2041 = vadd.f32 %v2037, %v2040
  %vm2042 = vweird.f32 %v1871
  %vm2043 = vweird.f32 %v2037
  %vm2044 = vmor %vm2042, %vm2043
  %v2045 = vsel %vm2044, %v2037, %v2041
  %v2046 = vand.u32 2147483647, %v1871
  %vm2047 = vcmp.eq.f32.partialorder %v2046, 8.507059e+37
  %v2048 = vand.u32 %v1871, 2147483648
  %v2049 = vor.u32 1.1754944e-38, %v2048
  %v2050 = vsel %vm2047, %v2049, %v2045
  %v2051 = vmul.f32 %v1800, %v2050
  %v2052 = vrcp.pop %v1874
  %v2053 = vmul.f32 %v1874, %v2052
  %v2054 = vsub.f32 1.0, %v2053
  %v2055 = vmul.f32 %v2052, %v2054
  %v2056 = vadd.f32 %v2052, %v2055
  %vm2057 = vweird.f32 %v1874
  %vm2058 = vweird.f32 %v2052
  %vm2059 = vmor %vm2057, %vm2058
  %v2060 = vsel %vm2059, %v2052, %v2056
  %v2061 = vand.u32 2147483647, %v1874
  %vm2062 = vcmp.eq.f32.partialorder %v2061, 8.507059e+37
  %v2063 = vand.u32 %v1874, 2147483648
  %v2064 = vor.u32 1.1754944e-38, %v2063
  %v2065 = vsel %vm2062, %v2064, %v2060
  %v2066 = vmul.f32 %v1802, %v2065
  %v2067 = vrcp.pop %v1877
  %v2068 = vmul.f32 %v1877, %v2067
  %v2069 = vsub.f32 1.0, %v2068
  %v2070 = vmul.f32 %v2067, %v2069
  %v2071 = vadd.f32 %v2067, %v2070
  %vm2072 = vweird.f32 %v1877
  %vm2073 = vweird.f32 %v2067
  %vm2074 = vmor %vm2072, %vm2073
  %v2075 = vsel %vm2074, %v2067, %v2071
  %v2076 = vand.u32 2147483647, %v1877
  %vm2077 = vcmp.eq.f32.partialorder %v2076, 8.507059e+37
  %v2078 = vand.u32 %v1877, 2147483648
  %v2079 = vor.u32 1.1754944e-38, %v2078
  %v2080 = vsel %vm2077, %v2079, %v2075
  %v2081 = vmul.f32 %v1804, %v2080
  %v2082 = vrcp.pop %v1880
  %v2083 = vmul.f32 %v1880, %v2082
  %v2084 = vsub.f32 1.0, %v2083
  %v2085 = vmul.f32 %v2082, %v2084
  %v2086 = vadd.f32 %v2082, %v2085
  %vm2087 = vweird.f32 %v1880
  %vm2088 = vweird.f32 %v2082
  %vm2089 = vmor %vm2087, %vm2088
  %v2090 = vsel %vm2089, %v2082, %v2086
  %v2091 = vand.u32 2147483647, %v1880
  %vm2092 = vcmp.eq.f32.partialorder %v2091, 8.507059e+37
  %v2093 = vand.u32 %v1880, 2147483648
  %v2094 = vor.u32 1.1754944e-38, %v2093
  %v2095 = vsel %vm2092, %v2094, %v2090
  %v2096 = vmul.f32 %v1806, %v2095
  %v2097 = vrcp.pop %v1883
  %v2098 = vmul.f32 %v1883, %v2097
  %v2099 = vsub.f32 1.0, %v2098
  %v2100 = vmul.f32 %v2097, %v2099
  %v2101 = vadd.f32 %v2097, %v2100
  %vm2102 = vweird.f32 %v1883
  %vm2103 = vweird.f32 %v2097
  %vm2104 = vmor %vm2102, %vm2103
  %v2105 = vsel %vm2104, %v2097, %v2101
  %v2106 = vand.u32 2147483647, %v1883
  %vm2107 = vcmp.eq.f32.partialorder %v2106, 8.507059e+37
  %v2108 = vand.u32 %v1883, 2147483648
  %v2109 = vor.u32 1.1754944e-38, %v2108
  %v2110 = vsel %vm2107, %v2109, %v2105
  %v2111 = vmul.f32 %v1808, %v2110
  %v2112 = vrcp.pop %v1886
  %v2113 = vmul.f32 %v1886, %v2112
  %v2114 = vsub.f32 1.0, %v2113
  %v2115 = vmul.f32 %v2112, %v2114
  %v2116 = vadd.f32 %v2112, %v2115
  %vm2117 = vweird.f32 %v1886
  %vm2118 = vweird.f32 %v2112
  %vm2119 = vmor %vm2117, %vm2118
  %v2120 = vsel %vm2119, %v2112, %v2116
  %v2121 = vand.u32 2147483647, %v1886
  %vm2122 = vcmp.eq.f32.partialorder %v2121, 8.507059e+37
  %v2123 = vand.u32 %v1886, 2147483648
  %v2124 = vor.u32 1.1754944e-38, %v2123
  %v2125 = vsel %vm2122, %v2124, %v2120
  %v2126 = vmul.f32 %v1810, %v2125
  %v2127 = vrcp.pop %v1889
  %v2128 = vmul.f32 %v1889, %v2127
  %v2129 = vsub.f32 1.0, %v2128
  %v2130 = vmul.f32 %v2127, %v2129
  %v2131 = vadd.f32 %v2127, %v2130
  %vm2132 = vweird.f32 %v1889
  %vm2133 = vweird.f32 %v2127
  %vm2134 = vmor %vm2132, %vm2133
  %v2135 = vsel %vm2134, %v2127, %v2131
  %v2136 = vand.u32 2147483647, %v1889
  %vm2137 = vcmp.eq.f32.partialorder %v2136, 8.507059e+37
  %v2138 = vand.u32 %v1889, 2147483648
  %v2139 = vor.u32 1.1754944e-38, %v2138
  %v2140 = vsel %vm2137, %v2139, %v2135
  %v2141 = vmul.f32 %v1812, %v2140
  %v2142 = vrcp.pop %v1892
  %v2143 = vmul.f32 %v1892, %v2142
  %v2144 = vsub.f32 1.0, %v2143
  %v2145 = vmul.f32 %v2142, %v2144
  %v2146 = vadd.f32 %v2142, %v2145
  %vm2147 = vweird.f32 %v1892
  %vm2148 = vweird.f32 %v2142
  %vm2149 = vmor %vm2147, %vm2148
  %v2150 = vsel %vm2149, %v2142, %v2146
  %v2151 = vand.u32 2147483647, %v1892
  %vm2152 = vcmp.eq.f32.partialorder %v2151, 8.507059e+37
  %v2153 = vand.u32 %v1892, 2147483648
  %v2154 = vor.u32 1.1754944e-38, %v2153
  %v2155 = vsel %vm2152, %v2154, %v2150
  %v2156 = vmul.f32 %v1814, %v2155
  %v2157 = vrcp.pop %v1895
  %v2158 = vmul.f32 %v1895, %v2157
  %v2159 = vsub.f32 1.0, %v2158
  %v2160 = vmul.f32 %v2157, %v2159
  %v2161 = vadd.f32 %v2157, %v2160
  %vm2162 = vweird.f32 %v1895
  %vm2163 = vweird.f32 %v2157
  %vm2164 = vmor %vm2162, %vm2163
  %v2165 = vsel %vm2164, %v2157, %v2161
  %v2166 = vand.u32 2147483647, %v1895
  %vm2167 = vcmp.eq.f32.partialorder %v2166, 8.507059e+37
  %v2168 = vand.u32 %v1895, 2147483648
  %v2169 = vor.u32 1.1754944e-38, %v2168
  %v2170 = vsel %vm2167, %v2169, %v2165
  %v2171 = vmul.f32 %v1816, %v2170
  %v2172 = vrcp.pop %v1898
  %v2173 = vmul.f32 %v1898, %v2172
  %v2174 = vsub.f32 1.0, %v2173
  %v2175 = vmul.f32 %v2172, %v2174
  %v2176 = vadd.f32 %v2172, %v2175
  %vm2177 = vweird.f32 %v1898
  %vm2178 = vweird.f32 %v2172
  %vm2179 = vmor %vm2177, %vm2178
  %v2180 = vsel %vm2179, %v2172, %v2176
  %v2181 = vand.u32 2147483647, %v1898
  %vm2182 = vcmp.eq.f32.partialorder %v2181, 8.507059e+37
  %v2183 = vand.u32 %v1898, 2147483648
  %v2184 = vor.u32 1.1754944e-38, %v2183
  %v2185 = vsel %vm2182, %v2184, %v2180
  %v2186 = vmul.f32 %v1818, %v2185
  %v2187 = vrcp.pop %v1901
  %v2188 = vmul.f32 %v1901, %v2187
  %v2189 = vsub.f32 1.0, %v2188
  %v2190 = vmul.f32 %v2187, %v2189
  %v2191 = vadd.f32 %v2187, %v2190
  %vm2192 = vweird.f32 %v1901
  %vm2193 = vweird.f32 %v2187
  %vm2194 = vmor %vm2192, %vm2193
  %v2195 = vsel %vm2194, %v2187, %v2191
  %v2196 = vand.u32 2147483647, %v1901
  %vm2197 = vcmp.eq.f32.partialorder %v2196, 8.507059e+37
  %v2198 = vand.u32 %v1901, 2147483648
  %v2199 = vor.u32 1.1754944e-38, %v2198
  %v2200 = vsel %vm2197, %v2199, %v2195
  %v2201 = vmul.f32 %v1820, %v2200
  %v2202 = vrcp.pop %v1904
  %v2203 = vmul.f32 %v1904, %v2202
  %v2204 = vsub.f32 1.0, %v2203
  %v2205 = vmul.f32 %v2202, %v2204
  %v2206 = vadd.f32 %v2202, %v2205
  %vm2207 = vweird.f32 %v1904
  %vm2208 = vweird.f32 %v2202
  %vm2209 = vmor %vm2207, %vm2208
  %v2210 = vsel %vm2209, %v2202, %v2206
  %v2211 = vand.u32 2147483647, %v1904
  %vm2212 = vcmp.eq.f32.partialorder %v2211, 8.507059e+37
  %v2213 = vand.u32 %v1904, 2147483648
  %v2214 = vor.u32 1.1754944e-38, %v2213
  %v2215 = vsel %vm2212, %v2214, %v2210
  %v2216 = vmul.f32 %v1822, %v2215
  %v2217 = vrcp.pop %v1907
  %v2218 = vmul.f32 %v1907, %v2217
  %v2219 = vsub.f32 1.0, %v2218
  %v2220 = vmul.f32 %v2217, %v2219
  %v2221 = vadd.f32 %v2217, %v2220
  %vm2222 = vweird.f32 %v1907
  %vm2223 = vweird.f32 %v2217
  %vm2224 = vmor %vm2222, %vm2223
  %v2225 = vsel %vm2224, %v2217, %v2221
  %v2226 = vand.u32 2147483647, %v1907
  %vm2227 = vcmp.eq.f32.partialorder %v2226, 8.507059e+37
  %v2228 = vand.u32 %v1907, 2147483648
  %v2229 = vor.u32 1.1754944e-38, %v2228
  %v2230 = vsel %vm2227, %v2229, %v2225
  %v2231 = vmul.f32 %v1824, %v2230
  %v2232 = vrcp.pop %v1910
  %v2233 = vmul.f32 %v1910, %v2232
  %v2234 = vsub.f32 1.0, %v2233
  %v2235 = vmul.f32 %v2232, %v2234
  %v2236 = vadd.f32 %v2232, %v2235
  %vm2237 = vweird.f32 %v1910
  %vm2238 = vweird.f32 %v2232
  %vm2239 = vmor %vm2237, %vm2238
  %v2240 = vsel %vm2239, %v2232, %v2236
  %v2241 = vand.u32 2147483647, %v1910
  %vm2242 = vcmp.eq.f32.partialorder %v2241, 8.507059e+37
  %v2243 = vand.u32 %v1910, 2147483648
  %v2244 = vor.u32 1.1754944e-38, %v2243
  %v2245 = vsel %vm2242, %v2244, %v2240
  %v2246 = vmul.f32 %v1826, %v2245
  %v2247 = vrcp.pop %v1913
  %v2248 = vmul.f32 %v1913, %v2247
  %v2249 = vsub.f32 1.0, %v2248
  %v2250 = vmul.f32 %v2247, %v2249
  %v2251 = vadd.f32 %v2247, %v2250
  %vm2252 = vweird.f32 %v1913
  %vm2253 = vweird.f32 %v2247
  %vm2254 = vmor %vm2252, %vm2253
  %v2255 = vsel %vm2254, %v2247, %v2251
  %v2256 = vand.u32 2147483647, %v1913
  %vm2257 = vcmp.eq.f32.partialorder %v2256, 8.507059e+37
  %v2258 = vand.u32 %v1913, 2147483648
  %v2259 = vor.u32 1.1754944e-38, %v2258
  %v2260 = vsel %vm2257, %v2259, %v2255
  %v2261 = vmul.f32 %v1828, %v2260
  %v2262 = vrcp.pop %v1916
  %v2263 = vmul.f32 %v1916, %v2262
  %v2264 = vsub.f32 1.0, %v2263
  %v2265 = vmul.f32 %v2262, %v2264
  %v2266 = vadd.f32 %v2262, %v2265
  %vm2267 = vweird.f32 %v1916
  %vm2268 = vweird.f32 %v2262
  %vm2269 = vmor %vm2267, %vm2268
  %v2270 = vsel %vm2269, %v2262, %v2266
  %v2271 = vand.u32 2147483647, %v1916
  %vm2272 = vcmp.eq.f32.partialorder %v2271, 8.507059e+37
  %v2273 = vand.u32 %v1916, 2147483648
  %v2274 = vor.u32 1.1754944e-38, %v2273
  %v2275 = vsel %vm2272, %v2274, %v2270
  %v2276 = vmul.f32 %v1830, %v2275
  %v2277 = vrcp.pop %v1919
  %v2278 = vmul.f32 %v1919, %v2277
  %v2279 = vsub.f32 1.0, %v2278
  %v2280 = vmul.f32 %v2277, %v2279
  %v2281 = vadd.f32 %v2277, %v2280
  %vm2282 = vweird.f32 %v1919
  %vm2283 = vweird.f32 %v2277
  %vm2284 = vmor %vm2282, %vm2283
  %v2285 = vsel %vm2284, %v2277, %v2281
  %v2286 = vand.u32 2147483647, %v1919
  %vm2287 = vcmp.eq.f32.partialorder %v2286, 8.507059e+37
  %v2288 = vand.u32 %v1919, 2147483648
  %v2289 = vor.u32 1.1754944e-38, %v2288
  %v2290 = vsel %vm2287, %v2289, %v2285
  %v2291 = vmul.f32 %v1832, %v2290
  %v2292 = vrcp.pop %v1922
  %v2293 = vmul.f32 %v1922, %v2292
  %v2294 = vsub.f32 1.0, %v2293
  %v2295 = vmul.f32 %v2292, %v2294
  %v2296 = vadd.f32 %v2292, %v2295
  %vm2297 = vweird.f32 %v1922
  %vm2298 = vweird.f32 %v2292
  %vm2299 = vmor %vm2297, %vm2298
  %v2300 = vsel %vm2299, %v2292, %v2296
  %v2301 = vand.u32 2147483647, %v1922
  %vm2302 = vcmp.eq.f32.partialorder %v2301, 8.507059e+37
  %v2303 = vand.u32 %v1922, 2147483648
  %v2304 = vor.u32 1.1754944e-38, %v2303
  %v2305 = vsel %vm2302, %v2304, %v2300
  %v2306 = vmul.f32 %v1834, %v2305
  %v2307 = vrcp.pop %v1925
  %v2308 = vmul.f32 %v1925, %v2307
  %v2309 = vsub.f32 1.0, %v2308
  %v2310 = vmul.f32 %v2307, %v2309
  %v2311 = vadd.f32 %v2307, %v2310
  %vm2312 = vweird.f32 %v1925
  %vm2313 = vweird.f32 %v2307
  %vm2314 = vmor %vm2312, %vm2313
  %v2315 = vsel %vm2314, %v2307, %v2311
  %v2316 = vand.u32 2147483647, %v1925
  %vm2317 = vcmp.eq.f32.partialorder %v2316, 8.507059e+37
  %v2318 = vand.u32 %v1925, 2147483648
  %v2319 = vor.u32 1.1754944e-38, %v2318
  %v2320 = vsel %vm2317, %v2319, %v2315
  %v2321 = vmul.f32 %v1836, %v2320
  %v2322 = vrcp.pop %v1928
  %v2323 = vmul.f32 %v1928, %v2322
  %v2324 = vsub.f32 1.0, %v2323
  %v2325 = vmul.f32 %v2322, %v2324
  %v2326 = vadd.f32 %v2322, %v2325
  %vm2327 = vweird.f32 %v1928
  %vm2328 = vweird.f32 %v2322
  %vm2329 = vmor %vm2327, %vm2328
  %v2330 = vsel %vm2329, %v2322, %v2326
  %v2331 = vand.u32 2147483647, %v1928
  %vm2332 = vcmp.eq.f32.partialorder %v2331, 8.507059e+37
  %v2333 = vand.u32 %v1928, 2147483648
  %v2334 = vor.u32 1.1754944e-38, %v2333
  %v2335 = vsel %vm2332, %v2334, %v2330
  %v2336 = vmul.f32 %v1838, %v2335
  %v2337 = vrcp.pop %v1931
  %v2338 = vmul.f32 %v1931, %v2337
  %v2339 = vsub.f32 1.0, %v2338
  %v2340 = vmul.f32 %v2337, %v2339
  %v2341 = vadd.f32 %v2337, %v2340
  %vm2342 = vweird.f32 %v1931
  %vm2343 = vweird.f32 %v2337
  %vm2344 = vmor %vm2342, %vm2343
  %v2345 = vsel %vm2344, %v2337, %v2341
  %v2346 = vand.u32 2147483647, %v1931
  %vm2347 = vcmp.eq.f32.partialorder %v2346, 8.507059e+37
  %v2348 = vand.u32 %v1931, 2147483648
  %v2349 = vor.u32 1.1754944e-38, %v2348
  %v2350 = vsel %vm2347, %v2349, %v2345
  %v2351 = vmul.f32 %v1840, %v2350
  %v2352 = vrcp.pop %v1934
  %v2353 = vmul.f32 %v1934, %v2352
  %v2354 = vsub.f32 1.0, %v2353
  %v2355 = vmul.f32 %v2352, %v2354
  %v2356 = vadd.f32 %v2352, %v2355
  %vm2357 = vweird.f32 %v1934
  %vm2358 = vweird.f32 %v2352
  %vm2359 = vmor %vm2357, %vm2358
  %v2360 = vsel %vm2359, %v2352, %v2356
  %v2361 = vand.u32 2147483647, %v1934
  %vm2362 = vcmp.eq.f32.partialorder %v2361, 8.507059e+37
  %v2363 = vand.u32 %v1934, 2147483648
  %v2364 = vor.u32 1.1754944e-38, %v2363
  %v2365 = vsel %vm2362, %v2364, %v2360
  %v2366 = vmul.f32 %v1842, %v2365
  %v2367 = vrcp.pop %v1937
  %v2368 = vmul.f32 %v1937, %v2367
  %v2369 = vsub.f32 1.0, %v2368
  %v2370 = vmul.f32 %v2367, %v2369
  %v2371 = vadd.f32 %v2367, %v2370
  %vm2372 = vweird.f32 %v1937
  %vm2373 = vweird.f32 %v2367
  %vm2374 = vmor %vm2372, %vm2373
  %v2375 = vsel %vm2374, %v2367, %v2371
  %v2376 = vand.u32 2147483647, %v1937
  %vm2377 = vcmp.eq.f32.partialorder %v2376, 8.507059e+37
  %v2378 = vand.u32 %v1937, 2147483648
  %v2379 = vor.u32 1.1754944e-38, %v2378
  %v2380 = vsel %vm2377, %v2379, %v2375
  %v2381 = vmul.f32 %v1844, %v2380
  %v2382 = vrcp.pop %v1940
  %v2383 = vmul.f32 %v1940, %v2382
  %v2384 = vsub.f32 1.0, %v2383
  %v2385 = vmul.f32 %v2382, %v2384
  %v2386 = vadd.f32 %v2382, %v2385
  %vm2387 = vweird.f32 %v1940
  %vm2388 = vweird.f32 %v2382
  %vm2389 = vmor %vm2387, %vm2388
  %v2390 = vsel %vm2389, %v2382, %v2386
  %v2391 = vand.u32 2147483647, %v1940
  %vm2392 = vcmp.eq.f32.partialorder %v2391, 8.507059e+37
  %v2393 = vand.u32 %v1940, 2147483648
  %v2394 = vor.u32 1.1754944e-38, %v2393
  %v2395 = vsel %vm2392, %v2394, %v2390
  %v2396 = vmul.f32 %v1846, %v2395
  %v2397 = vrcp.pop %v1943
  %v2398 = vmul.f32 %v1943, %v2397
  %v2399 = vsub.f32 1.0, %v2398
  %v2400 = vmul.f32 %v2397, %v2399
  %v2401 = vadd.f32 %v2397, %v2400
  %vm2402 = vweird.f32 %v1943
  %vm2403 = vweird.f32 %v2397
  %vm2404 = vmor %vm2402, %vm2403
  %v2405 = vsel %vm2404, %v2397, %v2401
  %v2406 = vand.u32 2147483647, %v1943
  %vm2407 = vcmp.eq.f32.partialorder %v2406, 8.507059e+37
  %v2408 = vand.u32 %v1943, 2147483648
  %v2409 = vor.u32 1.1754944e-38, %v2408
  %v2410 = vsel %vm2407, %v2409, %v2405
  %v2411 = vmul.f32 %v1848, %v2410
  %v2412 = vrcp.pop %v1946
  %v2413 = vmul.f32 %v1946, %v2412
  %v2414 = vsub.f32 1.0, %v2413
  %v2415 = vmul.f32 %v2412, %v2414
  %v2416 = vadd.f32 %v2412, %v2415
  %vm2417 = vweird.f32 %v1946
  %vm2418 = vweird.f32 %v2412
  %vm2419 = vmor %vm2417, %vm2418
  %v2420 = vsel %vm2419, %v2412, %v2416
  %v2421 = vand.u32 2147483647, %v1946
  %vm2422 = vcmp.eq.f32.partialorder %v2421, 8.507059e+37
  %v2423 = vand.u32 %v1946, 2147483648
  %v2424 = vor.u32 1.1754944e-38, %v2423
  %v2425 = vsel %vm2422, %v2424, %v2420
  %v2426 = vmul.f32 %v1850, %v2425
  %2428 = vset.pattern.permute.xlu0 0
  %2429 = vperm.xlu0 %2428, %v1961
  %v2430 = vpop.permute.xlu0 %2429
  %2433 = vset.pattern.permute.xlu0 0
  %2434 = vperm.xlu0 %2433, %v1976
  %v2435 = vpop.permute.xlu0 %2434
  %2438 = vset.pattern.permute.xlu0 0
  %2439 = vperm.xlu0 %2438, %v1991
  %v2440 = vpop.permute.xlu0 %2439
  %2443 = vset.pattern.permute.xlu0 0
  %2444 = vperm.xlu0 %2443, %v2006
  %v2445 = vpop.permute.xlu0 %2444
  %2448 = vset.pattern.permute.xlu0 0
  %2449 = vperm.xlu0 %2448, %v2021
  %v2450 = vpop.permute.xlu0 %2449
  %2453 = vset.pattern.permute.xlu0 0
  %2454 = vperm.xlu0 %2453, %v2036
  %v2455 = vpop.permute.xlu0 %2454
  %2458 = vset.pattern.permute.xlu0 0
  %2459 = vperm.xlu0 %2458, %v2051
  %v2460 = vpop.permute.xlu0 %2459
  %2463 = vset.pattern.permute.xlu0 0
  %2464 = vperm.xlu0 %2463, %v2066
  %v2465 = vpop.permute.xlu0 %2464
  %2468 = vset.pattern.permute.xlu0 0
  %2469 = vperm.xlu0 %2468, %v2081
  %v2470 = vpop.permute.xlu0 %2469
  %2473 = vset.pattern.permute.xlu0 0
  %2474 = vperm.xlu0 %2473, %v2096
  %v2475 = vpop.permute.xlu0 %2474
  %2478 = vset.pattern.permute.xlu0 0
  %2479 = vperm.xlu0 %2478, %v2111
  %v2480 = vpop.permute.xlu0 %2479
  %2483 = vset.pattern.permute.xlu0 0
  %2484 = vperm.xlu0 %2483, %v2126
  %v2485 = vpop.permute.xlu0 %2484
  %2488 = vset.pattern.permute.xlu0 0
  %2489 = vperm.xlu0 %2488, %v2141
  %v2490 = vpop.permute.xlu0 %2489
  %2493 = vset.pattern.permute.xlu0 0
  %2494 = vperm.xlu0 %2493, %v2156
  %v2495 = vpop.permute.xlu0 %2494
  %2498 = vset.pattern.permute.xlu0 0
  %2499 = vperm.xlu0 %2498, %v2171
  %v2500 = vpop.permute.xlu0 %2499
  %2503 = vset.pattern.permute.xlu0 0
  %2504 = vperm.xlu0 %2503, %v2186
  %v2505 = vpop.permute.xlu0 %2504
  %2508 = vset.pattern.permute.xlu0 0
  %2509 = vperm.xlu0 %2508, %v2201
  %v2510 = vpop.permute.xlu0 %2509
  %2513 = vset.pattern.permute.xlu0 0
  %2514 = vperm.xlu0 %2513, %v2216
  %v2515 = vpop.permute.xlu0 %2514
  %2518 = vset.pattern.permute.xlu0 0
  %2519 = vperm.xlu0 %2518, %v2231
  %v2520 = vpop.permute.xlu0 %2519
  %2523 = vset.pattern.permute.xlu0 0
  %2524 = vperm.xlu0 %2523, %v2246
  %v2525 = vpop.permute.xlu0 %2524
  %2528 = vset.pattern.permute.xlu0 0
  %2529 = vperm.xlu0 %2528, %v2261
  %v2530 = vpop.permute.xlu0 %2529
  %2533 = vset.pattern.permute.xlu0 0
  %2534 = vperm.xlu0 %2533, %v2276
  %v2535 = vpop.permute.xlu0 %2534
  %2538 = vset.pattern.permute.xlu0 0
  %2539 = vperm.xlu0 %2538, %v2291
  %v2540 = vpop.permute.xlu0 %2539
  %2543 = vset.pattern.permute.xlu0 0
  %2544 = vperm.xlu0 %2543, %v2306
  %v2545 = vpop.permute.xlu0 %2544
  %2548 = vset.pattern.permute.xlu0 0
  %2549 = vperm.xlu0 %2548, %v2321
  %v2550 = vpop.permute.xlu0 %2549
  %2553 = vset.pattern.permute.xlu0 0
  %2554 = vperm.xlu0 %2553, %v2336
  %v2555 = vpop.permute.xlu0 %2554
  %2558 = vset.pattern.permute.xlu0 0
  %2559 = vperm.xlu0 %2558, %v2351
  %v2560 = vpop.permute.xlu0 %2559
  %2563 = vset.pattern.permute.xlu0 0
  %2564 = vperm.xlu0 %2563, %v2366
  %v2565 = vpop.permute.xlu0 %2564
  %2568 = vset.pattern.permute.xlu0 0
  %2569 = vperm.xlu0 %2568, %v2381
  %v2570 = vpop.permute.xlu0 %2569
  %2573 = vset.pattern.permute.xlu0 0
  %2574 = vperm.xlu0 %2573, %v2396
  %v2575 = vpop.permute.xlu0 %2574
  %2578 = vset.pattern.permute.xlu0 0
  %2579 = vperm.xlu0 %2578, %v2411
  %v2580 = vpop.permute.xlu0 %2579
  %2583 = vset.pattern.permute.xlu0 0
  %2584 = vperm.xlu0 %2583, %v2426
  %v2585 = vpop.permute.xlu0 %2584
  %v2587 = vmul.f32 %v898, %v2430
  %v2588 = vmul.f32 %v900, %v2435
  %v2589 = vmul.f32 %v903, %v2440
  %v2590 = vmul.f32 %v905, %v2445
  %v2591 = vmul.f32 %v908, %v2450
  %v2592 = vmul.f32 %v910, %v2455
  %v2593 = vmul.f32 %v913, %v2460
  %v2594 = vmul.f32 %v915, %v2465
  %v2595 = vmul.f32 %v918, %v2470
  %v2596 = vmul.f32 %v920, %v2475
  %v2597 = vmul.f32 %v923, %v2480
  %v2598 = vmul.f32 %v925, %v2485
  %v2599 = vmul.f32 %v928, %v2490
  %v2600 = vmul.f32 %v930, %v2495
  %v2601 = vmul.f32 %v933, %v2500
  %v2602 = vmul.f32 %v935, %v2505
  %v2603 = vmul.f32 %v938, %v2510
  %v2604 = vmul.f32 %v940, %v2515
  %v2605 = vmul.f32 %v943, %v2520
  %v2606 = vmul.f32 %v945, %v2525
  %v2607 = vmul.f32 %v948, %v2530
  %v2608 = vmul.f32 %v950, %v2535
  %v2609 = vmul.f32 %v953, %v2540
  %v2610 = vmul.f32 %v955, %v2545
  %v2611 = vmul.f32 %v958, %v2550
  %v2612 = vmul.f32 %v960, %v2555
  %v2613 = vmul.f32 %v963, %v2560
  %v2614 = vmul.f32 %v965, %v2565
  %v2615 = vmul.f32 %v968, %v2570
  %v2616 = vmul.f32 %v970, %v2575
  %v2617 = vmul.f32 %v973, %v2580
  %v2618 = vmul.f32 %v975, %v2585
  %2619 = vset.pattern.permute.xlu0 1
  %2620 = vperm.xlu0 %2619, %v1961
  %v2621 = vpop.permute.xlu0 %2620
  %2623 = vset.pattern.permute.xlu0 1
  %2624 = vperm.xlu0 %2623, %v1976
  %v2625 = vpop.permute.xlu0 %2624
  %2627 = vset.pattern.permute.xlu0 1
  %2628 = vperm.xlu0 %2627, %v1991
  %v2629 = vpop.permute.xlu0 %2628
  %2631 = vset.pattern.permute.xlu0 1
  %2632 = vperm.xlu0 %2631, %v2006
  %v2633 = vpop.permute.xlu0 %2632
  %2635 = vset.pattern.permute.xlu0 1
  %2636 = vperm.xlu0 %2635, %v2021
  %v2637 = vpop.permute.xlu0 %2636
  %2639 = vset.pattern.permute.xlu0 1
  %2640 = vperm.xlu0 %2639, %v2036
  %v2641 = vpop.permute.xlu0 %2640
  %2643 = vset.pattern.permute.xlu0 1
  %2644 = vperm.xlu0 %2643, %v2051
  %v2645 = vpop.permute.xlu0 %2644
  %2647 = vset.pattern.permute.xlu0 1
  %2648 = vperm.xlu0 %2647, %v2066
  %v2649 = vpop.permute.xlu0 %2648
  %2651 = vset.pattern.permute.xlu0 1
  %2652 = vperm.xlu0 %2651, %v2081
  %v2653 = vpop.permute.xlu0 %2652
  %2655 = vset.pattern.permute.xlu0 1
  %2656 = vperm.xlu0 %2655, %v2096
  %v2657 = vpop.permute.xlu0 %2656
  %2659 = vset.pattern.permute.xlu0 1
  %2660 = vperm.xlu0 %2659, %v2111
  %v2661 = vpop.permute.xlu0 %2660
  %2663 = vset.pattern.permute.xlu0 1
  %2664 = vperm.xlu0 %2663, %v2126
  %v2665 = vpop.permute.xlu0 %2664
  %2667 = vset.pattern.permute.xlu0 1
  %2668 = vperm.xlu0 %2667, %v2141
  %v2669 = vpop.permute.xlu0 %2668
  %2671 = vset.pattern.permute.xlu0 1
  %2672 = vperm.xlu0 %2671, %v2156
  %v2673 = vpop.permute.xlu0 %2672
  %2675 = vset.pattern.permute.xlu0 1
  %2676 = vperm.xlu0 %2675, %v2171
  %v2677 = vpop.permute.xlu0 %2676
  %2679 = vset.pattern.permute.xlu0 1
  %2680 = vperm.xlu0 %2679, %v2186
  %v2681 = vpop.permute.xlu0 %2680
  %2683 = vset.pattern.permute.xlu0 1
  %2684 = vperm.xlu0 %2683, %v2201
  %v2685 = vpop.permute.xlu0 %2684
  %2687 = vset.pattern.permute.xlu0 1
  %2688 = vperm.xlu0 %2687, %v2216
  %v2689 = vpop.permute.xlu0 %2688
  %2691 = vset.pattern.permute.xlu0 1
  %2692 = vperm.xlu0 %2691, %v2231
  %v2693 = vpop.permute.xlu0 %2692
  %2695 = vset.pattern.permute.xlu0 1
  %2696 = vperm.xlu0 %2695, %v2246
  %v2697 = vpop.permute.xlu0 %2696
  %2699 = vset.pattern.permute.xlu0 1
  %2700 = vperm.xlu0 %2699, %v2261
  %v2701 = vpop.permute.xlu0 %2700
  %2703 = vset.pattern.permute.xlu0 1
  %2704 = vperm.xlu0 %2703, %v2276
  %v2705 = vpop.permute.xlu0 %2704
  %2707 = vset.pattern.permute.xlu0 1
  %2708 = vperm.xlu0 %2707, %v2291
  %v2709 = vpop.permute.xlu0 %2708
  %2711 = vset.pattern.permute.xlu0 1
  %2712 = vperm.xlu0 %2711, %v2306
  %v2713 = vpop.permute.xlu0 %2712
  %2715 = vset.pattern.permute.xlu0 1
  %2716 = vperm.xlu0 %2715, %v2321
  %v2717 = vpop.permute.xlu0 %2716
  %2719 = vset.pattern.permute.xlu0 1
  %2720 = vperm.xlu0 %2719, %v2336
  %v2721 = vpop.permute.xlu0 %2720
  %2723 = vset.pattern.permute.xlu0 1
  %2724 = vperm.xlu0 %2723, %v2351
  %v2725 = vpop.permute.xlu0 %2724
  %2727 = vset.pattern.permute.xlu0 1
  %2728 = vperm.xlu0 %2727, %v2366
  %v2729 = vpop.permute.xlu0 %2728
  %2731 = vset.pattern.permute.xlu0 1
  %2732 = vperm.xlu0 %2731, %v2381
  %v2733 = vpop.permute.xlu0 %2732
  %2735 = vset.pattern.permute.xlu0 1
  %2736 = vperm.xlu0 %2735, %v2396
  %v2737 = vpop.permute.xlu0 %2736
  %2739 = vset.pattern.permute.xlu0 1
  %2740 = vperm.xlu0 %2739, %v2411
  %v2741 = vpop.permute.xlu0 %2740
  %2743 = vset.pattern.permute.xlu0 1
  %2744 = vperm.xlu0 %2743, %v2426
  %v2745 = vpop.permute.xlu0 %2744
  %v2747 = vmul.f32 %v1418, %v2621
  %v2748 = vmul.f32 %v1420, %v2625
  %v2749 = vmul.f32 %v1423, %v2629
  %v2750 = vmul.f32 %v1425, %v2633
  %v2751 = vmul.f32 %v1428, %v2637
  %v2752 = vmul.f32 %v1430, %v2641
  %v2753 = vmul.f32 %v1433, %v2645
  %v2754 = vmul.f32 %v1435, %v2649
  %v2755 = vmul.f32 %v1438, %v2653
  %v2756 = vmul.f32 %v1440, %v2657
  %v2757 = vmul.f32 %v1443, %v2661
  %v2758 = vmul.f32 %v1445, %v2665
  %v2759 = vmul.f32 %v1448, %v2669
  %v2760 = vmul.f32 %v1450, %v2673
  %v2761 = vmul.f32 %v1453, %v2677
  %v2762 = vmul.f32 %v1455, %v2681
  %v2763 = vmul.f32 %v1458, %v2685
  %v2764 = vmul.f32 %v1460, %v2689
  %v2765 = vmul.f32 %v1463, %v2693
  %v2766 = vmul.f32 %v1465, %v2697
  %v2767 = vmul.f32 %v1468, %v2701
  %v2768 = vmul.f32 %v1470, %v2705
  %v2769 = vmul.f32 %v1473, %v2709
  %v2770 = vmul.f32 %v1475, %v2713
  %v2771 = vmul.f32 %v1478, %v2717
  %v2772 = vmul.f32 %v1480, %v2721
  %v2773 = vmul.f32 %v1483, %v2725
  %v2774 = vmul.f32 %v1485, %v2729
  %v2775 = vmul.f32 %v1488, %v2733
  %v2776 = vmul.f32 %v1490, %v2737
  %v2777 = vmul.f32 %v1493, %v2741
  %v2778 = vmul.f32 %v1495, %v2745
  %v2779 = vadd.f32 %v2587, %v2747
  %v2780 = vadd.f32 %v2588, %v2748
  %v2781 = vadd.f32 %v2589, %v2749
  %v2782 = vadd.f32 %v2590, %v2750
  %v2783 = vadd.f32 %v2591, %v2751
  %v2784 = vadd.f32 %v2592, %v2752
  %v2785 = vadd.f32 %v2593, %v2753
  %v2786 = vadd.f32 %v2594, %v2754
  %v2787 = vadd.f32 %v2595, %v2755
  %v2788 = vadd.f32 %v2596, %v2756
  %v2789 = vadd.f32 %v2597, %v2757
  %v2790 = vadd.f32 %v2598, %v2758
  %v2791 = vadd.f32 %v2599, %v2759
  %v2792 = vadd.f32 %v2600, %v2760
  %v2793 = vadd.f32 %v2601, %v2761
  %v2794 = vadd.f32 %v2602, %v2762
  %v2795 = vadd.f32 %v2603, %v2763
  %v2796 = vadd.f32 %v2604, %v2764
  %v2797 = vadd.f32 %v2605, %v2765
  %v2798 = vadd.f32 %v2606, %v2766
  %v2799 = vadd.f32 %v2607, %v2767
  %v2800 = vadd.f32 %v2608, %v2768
  %v2801 = vadd.f32 %v2609, %v2769
  %v2802 = vadd.f32 %v2610, %v2770
  %v2803 = vadd.f32 %v2611, %v2771
  %v2804 = vadd.f32 %v2612, %v2772
  %v2805 = vadd.f32 %v2613, %v2773
  %v2806 = vadd.f32 %v2614, %v2774
  %v2807 = vadd.f32 %v2615, %v2775
  %v2808 = vadd.f32 %v2616, %v2776
  %v2809 = vadd.f32 %v2617, %v2777
  %v2810 = vadd.f32 %v2618, %v2778
  %v2811 = vtanh.pop %v2779
  %v2812 = vtanh.pop %v2780
  %v2813 = vtanh.pop %v2781
  %v2814 = vtanh.pop %v2782
  %v2815 = vtanh.pop %v2783
  %v2816 = vtanh.pop %v2784
  %v2817 = vtanh.pop %v2785
  %v2818 = vtanh.pop %v2786
  %v2819 = vtanh.pop %v2787
  %v2820 = vtanh.pop %v2788
  %v2821 = vtanh.pop %v2789
  %v2822 = vtanh.pop %v2790
  %v2823 = vtanh.pop %v2791
  %v2824 = vtanh.pop %v2792
  %v2825 = vtanh.pop %v2793
  %v2826 = vtanh.pop %v2794
  %v2827 = vtanh.pop %v2795
  %v2828 = vtanh.pop %v2796
  %v2829 = vtanh.pop %v2797
  %v2830 = vtanh.pop %v2798
  %v2831 = vtanh.pop %v2799
  %v2832 = vtanh.pop %v2800
  %v2833 = vtanh.pop %v2801
  %v2834 = vtanh.pop %v2802
  %v2835 = vtanh.pop %v2803
  %v2836 = vtanh.pop %v2804
  %v2837 = vtanh.pop %v2805
  %v2838 = vtanh.pop %v2806
  %v2839 = vtanh.pop %v2807
  %v2840 = vtanh.pop %v2808
  %v2841 = vtanh.pop %v2809
  %v2842 = vtanh.pop %v2810
  %2843 = vst.msk [vmem:[%s9] sm:$0xff] %vm628, %v2811
  %2844 = vst.msk [vmem:[%s9 + $0x8] sm:$0xff] %vm628, %v2812
  %2845 = vst.msk [vmem:[%s9 + $0x10] sm:$0xff] %vm628, %v2813
  %2846 = vst.msk [vmem:[%s9 + $0x18] sm:$0xff] %vm628, %v2814
  %2847 = vst.msk [vmem:[%s9 + $0x20] sm:$0xff] %vm628, %v2815
  %2848 = vst.msk [vmem:[%s9 + $0x28] sm:$0xff] %vm628, %v2816
  %2849 = vst.msk [vmem:[%s9 + $0x30] sm:$0xff] %vm628, %v2817
  %2850 = vst.msk [vmem:[%s9 + $0x38] sm:$0xff] %vm628, %v2818
  %2851 = vst.msk [vmem:[%s9 + $0x40] sm:$0xff] %vm628, %v2819
  %2852 = vst.msk [vmem:[%s9 + $0x48] sm:$0xff] %vm628, %v2820
  %2853 = vst.msk [vmem:[%s9 + $0x50] sm:$0xff] %vm628, %v2821
  %2854 = vst.msk [vmem:[%s9 + $0x58] sm:$0xff] %vm628, %v2822
  %2855 = vst.msk [vmem:[%s9 + $0x60] sm:$0xff] %vm628, %v2823
  %2856 = vst.msk [vmem:[%s9 + $0x68] sm:$0xff] %vm628, %v2824
  %2857 = vst.msk [vmem:[%s9 + $0x70] sm:$0xff] %vm628, %v2825
  %2858 = vst.msk [vmem:[%s9 + $0x78] sm:$0xff] %vm628, %v2826
  %2859 = vst.msk [vmem:[%s9 + $0x80] sm:$0xff] %vm628, %v2827
  %2860 = vst.msk [vmem:[%s9 + $0x88] sm:$0xff] %vm628, %v2828
  %2861 = vst.msk [vmem:[%s9 + $0x90] sm:$0xff] %vm628, %v2829
  %2862 = vst.msk [vmem:[%s9 + $0x98] sm:$0xff] %vm628, %v2830
  %2863 = vst.msk [vmem:[%s9 + $0xa0] sm:$0xff] %vm628, %v2831
  %2864 = vst.msk [vmem:[%s9 + $0xa8] sm:$0xff] %vm628, %v2832
  %2865 = vst.msk [vmem:[%s9 + $0xb0] sm:$0xff] %vm628, %v2833
  %2866 = vst.msk [vmem:[%s9 + $0xb8] sm:$0xff] %vm628, %v2834
  %2867 = vst.msk [vmem:[%s9 + $0xc0] sm:$0xff] %vm628, %v2835
  %2868 = vst.msk [vmem:[%s9 + $0xc8] sm:$0xff] %vm628, %v2836
  %2869 = vst.msk [vmem:[%s9 + $0xd0] sm:$0xff] %vm628, %v2837
  %2870 = vst.msk [vmem:[%s9 + $0xd8] sm:$0xff] %vm628, %v2838
  %2871 = vst.msk [vmem:[%s9 + $0xe0] sm:$0xff] %vm628, %v2839
  %2872 = vst.msk [vmem:[%s9 + $0xe8] sm:$0xff] %vm628, %v2840
  %2873 = vst.msk [vmem:[%s9 + $0xf0] sm:$0xff] %vm628, %v2841
  %2874 = vst.msk [vmem:[%s9 + $0xf8] sm:$0xff] %vm628, %v2842
  %2875 = vst.msk [vmem:[%s10] sm:$0xff] %vm1658, %v1626
  %2876 = vst.msk [vmem:[%s10 + $0x8] sm:$0xff] %vm1658, %v1627
  %2877 = vst.msk [vmem:[%s10 + $0x10] sm:$0xff] %vm1658, %v1628
  %2878 = vst.msk [vmem:[%s10 + $0x18] sm:$0xff] %vm1658, %v1629
  %2879 = vst.msk [vmem:[%s10 + $0x20] sm:$0xff] %vm1658, %v1630
  %2880 = vst.msk [vmem:[%s10 + $0x28] sm:$0xff] %vm1658, %v1631
  %2881 = vst.msk [vmem:[%s10 + $0x30] sm:$0xff] %vm1658, %v1632
  %2882 = vst.msk [vmem:[%s10 + $0x38] sm:$0xff] %vm1658, %v1633
  %2883 = vst.msk [vmem:[%s10 + $0x40] sm:$0xff] %vm1658, %v1634
  %2884 = vst.msk [vmem:[%s10 + $0x48] sm:$0xff] %vm1658, %v1635
  %2885 = vst.msk [vmem:[%s10 + $0x50] sm:$0xff] %vm1658, %v1636
  %2886 = vst.msk [vmem:[%s10 + $0x58] sm:$0xff] %vm1658, %v1637
  %2887 = vst.msk [vmem:[%s10 + $0x60] sm:$0xff] %vm1658, %v1638
  %2888 = vst.msk [vmem:[%s10 + $0x68] sm:$0xff] %vm1658, %v1639
  %2889 = vst.msk [vmem:[%s10 + $0x70] sm:$0xff] %vm1658, %v1640
  %2890 = vst.msk [vmem:[%s10 + $0x78] sm:$0xff] %vm1658, %v1641
  %2891 = vst.msk [vmem:[%s10 + $0x80] sm:$0xff] %vm1658, %v1642
  %2892 = vst.msk [vmem:[%s10 + $0x88] sm:$0xff] %vm1658, %v1643
  %2893 = vst.msk [vmem:[%s10 + $0x90] sm:$0xff] %vm1658, %v1644
  %2894 = vst.msk [vmem:[%s10 + $0x98] sm:$0xff] %vm1658, %v1645
  %2895 = vst.msk [vmem:[%s10 + $0xa0] sm:$0xff] %vm1658, %v1646
  %2896 = vst.msk [vmem:[%s10 + $0xa8] sm:$0xff] %vm1658, %v1647
  %2897 = vst.msk [vmem:[%s10 + $0xb0] sm:$0xff] %vm1658, %v1648
  %2898 = vst.msk [vmem:[%s10 + $0xb8] sm:$0xff] %vm1658, %v1649
  %2899 = vst.msk [vmem:[%s10 + $0xc0] sm:$0xff] %vm1658, %v1650
  %2900 = vst.msk [vmem:[%s10 + $0xc8] sm:$0xff] %vm1658, %v1651
  %2901 = vst.msk [vmem:[%s10 + $0xd0] sm:$0xff] %vm1658, %v1652
  %2902 = vst.msk [vmem:[%s10 + $0xd8] sm:$0xff] %vm1658, %v1653
  %2903 = vst.msk [vmem:[%s10 + $0xe0] sm:$0xff] %vm1658, %v1654
  %2904 = vst.msk [vmem:[%s10 + $0xe8] sm:$0xff] %vm1658, %v1655
  %2905 = vst.msk [vmem:[%s10 + $0xf0] sm:$0xff] %vm1658, %v1656
  %2906 = vst.msk [vmem:[%s10 + $0xf8] sm:$0xff] %vm1658, %v1657
  // Predicated region
  $region38: #{kma_forward.1} parent=0 // pred_check
    _
  $region39: #{kma_forward.1} parent=0 // pred_check_branch
    %2908 = sbr.rel (0) target = $region41
  $region40: #{kma_forward.1} parent=0 // pred_region
    _
  $region41: #{kma_forward.1} parent=0 // pred_fallthru
    _
  // Predicated region
  $region42: #{kma_forward.1} parent=0 // pred_check
    _
  $region43: #{kma_forward.1} parent=0 // pred_check_branch
    %2910 = sbr.rel (0) target = $region45
  $region44: #{kma_forward.1} parent=0 // pred_region
    _
  $region45: #{kma_forward.1} parent=0 // pred_fallthru
    _
  // Predicated region
  $region46: #{kma_forward.1} parent=0 // pred_check
    _
  $region47: #{kma_forward.1} parent=0 // pred_check_branch
    %2912 = sbr.rel (0) target = $region49
  $region48: #{kma_forward.1} parent=0 // pred_region
    _
  $region49: #{kma_forward.1} parent=0 // pred_fallthru
    _
  // Predicated region
  $region50: #{kma_forward.1} parent=0 // pred_check
    _
  $region51: #{kma_forward.1} parent=0 // pred_check_branch
    %2914 = sbr.rel (0) target = $region53
  $region52: #{kma_forward.1} parent=0 // pred_region
    _
  $region53: #{kma_forward.1} parent=0 // pred_fallthru
    _

</llo_original>
